<compile_context>
chip_gen: v7x
topology: tpu7x:2x2x1
jax: 0.10.0
libtpu: 0.0.40
codegen_flags: <defaults>
</compile_context>

<pallas_src>
import functools

import jax
import jax.numpy as jnp
import numpy as np
from jax.experimental import pallas as pl
from jax.experimental.pallas import tpu as pltpu

_MIN_TILE = 128  # never run the MXU with fewer than 128 rows per tile


def _round_up(v, m):
    return (v + m - 1) // m * m


def _pad2(a, rows, cols):
    r, c = a.shape
    return jnp.pad(a, ((0, rows - r), (0, cols - c)))


def _softplus(x):
    # numerically-stable softplus, matches torch.nn.Softplus (beta=1)
    return jnp.maximum(x, 0.0) + jnp.log1p(jnp.exp(-jnp.abs(x)))


def _vmem_budget_bytes():
    """Per-generation VMEM budget: 64 MiB on v5e/v6e (128 MiB chips),
    up to 48 MiB on v7x (64 MiB per TensorCore)."""
    cap = 128 * 1024 * 1024
    try:
        cap = int(getattr(pltpu.get_tpu_info(), "vmem_capacity_bytes", cap))
    except Exception:
        pass
    if cap <= 64 * 1024 * 1024:                      # v7x-class core
        return min(3 * cap // 4, 48 * 1024 * 1024)
    return min(cap // 2, 64 * 1024 * 1024)


def _auto_block_rows(Dp, Lp, Hep, Hdp, budget):
    """Largest power-of-two row tile in [128, 1024] whose working set fits ~0.8*budget."""
    # Single-buffered resident weights (pl.Buffered(1)): bf16 matrices + f32 biases.
    w_bytes = (2 * (Dp * Hep + Hep * 2 * Lp + Lp * Hdp + Hdp * Dp)
               + 4 * (Hep + 2 * Lp + Hdp + Dp))
    tb = 1024
    while tb > _MIN_TILE:
        per_row = (
            2 * 2 * Dp            # x (bf16), double-buffered
            + 2 * 2 * Lp          # eps (bf16), double-buffered
            + 2 * 2 * Dp          # theta out (bf16), double-buffered
            + 2 * 4 * Lp          # z out (f32), double-buffered
            + 2 * 2 * 4 * Lp      # mu + sigma^2 outs (f32), double-buffered
            + 2 * 4 * Lp          # mu / sigma^2 VMEM scratch
            + 4 * (Hep + 2 * Lp + Hdp + Dp))   # in-kernel f32 intermediates (approx)
        if w_bytes + tb * per_row <= (budget * 4) // 5:
            break
        tb //= 2
    return tb


def iwae_kernel(x_ref, eps_ref,
                we_ref, be_ref,          # encoder hidden layer
                wh_ref, bh_ref,          # fused mu|sigma^2 heads
                wd1_ref, bd1_ref,        # decoder hidden layer
                wd2_ref, bd2_ref,        # decoder output layer
                mu_ref, sig2_ref, theta_ref, z_ref,
                mu_scr, sig2_scr,
                *, latent_pad):
    f32, bf16 = jnp.float32, jnp.bfloat16
    j = pl.program_id(1)   # importance-sample index (arbitrary / sequential axis)

    # ---- encoder: once per batch block, reused for all k importance samples ----
    @pl.when(j == 0)
    def _encode():
        x = x_ref[...]                                                   # (TB, Dp) bf16
        h = jnp.tanh(jnp.dot(x, we_ref[...], preferred_element_type=f32)
                     + be_ref[...])                                      # (TB, Hep) f32
        heads = jnp.dot(h.astype(bf16), wh_ref[...],
                        preferred_element_type=f32) + bh_ref[...]        # (TB, 2*Lp)
        mu = heads[:, :latent_pad]
        sig2 = _softplus(heads[:, latent_pad:])
        mu_scr[...] = mu
        sig2_scr[...] = sig2
        # Output block index is constant across k -> store once, not k times.
        mu_ref[...] = mu
        sig2_ref[...] = sig2

    # ---- reparameterized sample + decoder (every (batch-block, k) grid step) ----
    # z = mu + sigma^2 * eps : matches the PyTorch module (eps scaled by sigma_2,
    # NOT by its square root).
    z = mu_scr[...] + sig2_scr[...] * eps_ref[0].astype(f32)            # (TB, Lp) f32
    z_ref[0] = z
    hd = jnp.tanh(jnp.dot(z.astype(bf16), wd1_ref[...],
                          preferred_element_type=f32) + bd1_ref[...])   # (TB, Hdp)
    logits = jnp.dot(hd.astype(bf16), wd2_ref[...],
                     preferred_element_type=f32) + bd2_ref[...]         # (TB, Dp)
    theta_ref[0] = jax.nn.sigmoid(logits).astype(theta_ref.dtype)       # bf16 writeback


@functools.partial(jax.jit, static_argnames=("k", "block_rows"))
def iwae_forward(x, eps, params, k, block_rows=None):
    """x: (B, H, W) or (B, D); eps: (k, B, L) (or (B, L) when k == 1)."""
    if x.ndim > 2:
        x = x.reshape(-1, x.shape[-1] * x.shape[-2])
    if eps.ndim == 2:
        eps = eps[None]

    B, D = x.shape
    L = params["wmu"].shape[1]
    Henc = params["we"].shape[1]
    Hdec = params["wd1"].shape[1]

    # lane-dense padded feature dims (multiples of 128)
    Lp = _round_up(L, 128)
    Dp = _round_up(D, 128)
    Hep = _round_up(Henc, 128)
    Hdp = _round_up(Hdec, 128)

    budget = _vmem_budget_bytes()
    if block_rows is not None:                  # debug override only
        TB = _round_up(block_rows, 8)
    else:
        target = _auto_block_rows(Dp, Lp, Hep, Hdp, budget)
        TB = min(target, _round_up(B, _MIN_TILE))
        # The batch axis is the only "parallel" axis; on v7x (2 TensorCores)
        # make sure it can split into >= 2 blocks whenever the batch allows it.
        while TB > _MIN_TILE and (B + TB - 1) // TB < 2:
            TB //= 2
        TB = max(TB, _MIN_TILE)
    Bp = _round_up(B, TB)
    nb = Bp // TB

    f32, bf16 = jnp.float32, jnp.bfloat16

    # bf16 inputs (halve x / eps DMA; x fed to the bf16 MXU anyway).
    # Zero-padded lanes/rows contribute zero to every matmul (padded sigma^2
    # lanes hold softplus(0)=ln2, but they multiply zero-padded eps and are
    # stripped below, so nothing downstream sees them).
    xp = jnp.pad(x.astype(bf16), ((0, Bp - B), (0, Dp - D)))
    epsp = jnp.pad(eps.astype(bf16), ((0, 0), (0, Bp - B), (0, Lp - L)))

    # bf16 weights (halve weight DMA, feed the bf16 MXU); f32 biases.
    we = _pad2(params["we"], Dp, Hep).astype(bf16)
    be = _pad2(params["be"], 1, Hep).astype(f32)
    wh = jnp.concatenate([_pad2(params["wmu"], Hep, Lp),
                          _pad2(params["ws"], Hep, Lp)], axis=1).astype(bf16)
    bh = jnp.concatenate([_pad2(params["bmu"], 1, Lp),
                          _pad2(params["bs"], 1, Lp)], axis=1).astype(f32)
    wd1 = _pad2(params["wd1"], Lp, Hdp).astype(bf16)
    bd1 = _pad2(params["bd1"], 1, Hdp).astype(f32)
    wd2 = _pad2(params["wd2"], Hdp, Dp).astype(bf16)
    bd2 = _pad2(params["bd2"], 1, Dp).astype(f32)

    def wspec(shape):
        # Constant index_map -> block stays VMEM-resident for the whole grid;
        # single-buffer it (no point double-buffering a block that never changes).
        try:
            return pl.BlockSpec(shape, lambda i, j: (0, 0),
                                pipeline_mode=pl.Buffered(1))
        except TypeError:   # older API without pipeline_mode
            return pl.BlockSpec(shape, lambda i, j: (0, 0))

    mu, sig2, theta, z = pl.pallas_call(
        functools.partial(iwae_kernel, latent_pad=Lp),
        out_shape=(
            jax.ShapeDtypeStruct((Bp, Lp), f32),          # mu
            jax.ShapeDtypeStruct((Bp, Lp), f32),          # sigma^2
            jax.ShapeDtypeStruct((k, Bp, Dp), bf16),      # theta (bf16 writeback)
            jax.ShapeDtypeStruct((k, Bp, Lp), f32),       # z
        ),
        grid=(nb, k),
        in_specs=[
            pl.BlockSpec((TB, Dp), lambda i, j: (i, 0)),        # x (no re-DMA across k)
            pl.BlockSpec((1, TB, Lp), lambda i, j: (j, i, 0)),  # eps
            wspec((Dp, Hep)), wspec((1, Hep)),
            wspec((Hep, 2 * Lp)), wspec((1, 2 * Lp)),
            wspec((Lp, Hdp)), wspec((1, Hdp)),
            wspec((Hdp, Dp)), wspec((1, Dp)),
        ],
        out_specs=(
            pl.BlockSpec((TB, Lp), lambda i, j: (i, 0)),
            pl.BlockSpec((TB, Lp), lambda i, j: (i, 0)),
            pl.BlockSpec((1, TB, Dp), lambda i, j: (j, i, 0)),
            pl.BlockSpec((1, TB, Lp), lambda i, j: (j, i, 0)),
        ),
        scratch_shapes=[pltpu.VMEM((TB, Lp), f32),   # mu, persists across k
                        pltpu.VMEM((TB, Lp), f32)],  # sigma^2, persists across k
        compiler_params=pltpu.CompilerParams(
            dimension_semantics=("parallel", "arbitrary"),
            vmem_limit_bytes=int(budget),
        ),
    )(xp, epsp, we, be, wh, bh, wd1, bd1, wd2, bd2)

    # strip padding, restore PyTorch output shapes / dtypes
    mu = mu[:B, :L]
    sig2 = sig2[:B, :L]
    theta = theta[:, :B, :D].astype(f32)
    z = z[:, :B, :L]
    if k == 1:
        theta, z = theta[0], z[0]
    return mu, sig2, theta, z


def init_params(key, in_features, hidden_enc, hidden_dec, latent):
    """torch-nn.Linear-style init: U(-1/sqrt(fan_in), 1/sqrt(fan_in)); w stored (in, out)."""
    def linear(key, fan_in, fan_out):
        kw, kb = jax.random.split(key)
        bound = 1.0 / np.sqrt(fan_in)
        w = jax.random.uniform(kw, (fan_in, fan_out), jnp.float32, -bound, bound)
        b = jax.random.uniform(kb, (1, fan_out), jnp.float32, -bound, bound)
        return w, b

    ks = jax.random.split(key, 5)
    we, be = linear(ks[0], in_features, hidden_enc)
    wmu, bmu = linear(ks[1], hidden_enc, latent)
    ws, bs = linear(ks[2], hidden_enc, latent)
    wd1, bd1 = linear(ks[3], latent, hidden_dec)
    wd2, bd2 = linear(ks[4], hidden_dec, in_features)
    return dict(we=we, be=be, wmu=wmu, bmu=bmu, ws=ws, bs=bs,
                wd1=wd1, bd1=bd1, wd2=wd2, bd2=bd2)


def iwae_reference(x, eps, p, k):
    """Pure-JAX reference with the same bf16-operand / f32-accumulate numerics."""
    if x.ndim > 2:
        x = x.reshape(-1, x.shape[-1] * x.shape[-2])
    if eps.ndim == 2:
        eps = eps[None]
    f32, bf16 = jnp.float32, jnp.bfloat16
    eps = eps.astype(bf16).astype(f32)       # kernel receives bf16 eps
    dot = lambda a, b: jnp.dot(a.astype(bf16), b.astype(bf16), preferred_element_type=f32)
    h = jnp.tanh(dot(x, p["we"]) + p["be"])
    mu = dot(h, p["wmu"]) + p["bmu"]
    sig2 = jax.nn.softplus(dot(h, p["ws"]) + p["bs"])
    z = mu[None] + sig2[None] * eps                       # (k, B, L)
    hd = jnp.tanh(dot(z, p["wd1"]) + p["bd1"])
    theta = jax.nn.sigmoid(dot(hd, p["wd2"]) + p["bd2"])
    if k == 1:
        z, theta = z[0], theta[0]
    return mu, sig2, theta, z


if __name__ == "__main__":
    # Small image-like batch: in_features = 16*16 = 256.
    B, H, W = 16, 16, 16
    hidden_enc, hidden_dec, latent, k = 64, 64, 8, 4
    in_features = H * W

    key = jax.random.PRNGKey(0)
    kx, keps, kparam = jax.random.split(key, 3)
    x = jax.random.uniform(kx, (B, H, W), jnp.float32)           # pixel-like input
    # TODO(synk): torch.randn lives inside IWAE.sample_latent; eps is drawn host-side
    # and passed in so the kernel stays deterministic and reference-comparable.
    eps = jax.random.normal(keps, (k, B, latent), jnp.float32)
    params = init_params(kparam, in_features, hidden_enc, hidden_dec, latent)

    # no block_rows override: the auto tile logic picks a lane/MXU-friendly tile.
    mu, sig2, theta, z = jax.block_until_ready(iwae_forward(x, eps, params, k=k))

    # verify against a pure-JAX reference with identical bf16-matmul numerics
    mu_r, sig2_r, theta_r, z_r = iwae_reference(x, eps, params, k)
    for got, ref in ((mu, mu_r), (sig2, sig2_r), (z, z_r)):
        np.testing.assert_allclose(np.asarray(got), np.asarray(ref),
                                   rtol=5e-3, atol=5e-3)
    # theta is stored as bf16 in the kernel (halved writeback) -> looser tolerance
    np.testing.assert_allclose(np.asarray(theta), np.asarray(theta_r),
                               rtol=1e-2, atol=1e-2)

    assert mu.shape == (B, latent) and sig2.shape == (B, latent)
    assert z.shape == (k, B, latent) and theta.shape == (k, B, in_features)

    # also exercise the k == 1 path (squeezed shapes, like the PyTorch module)
    eps1 = jax.random.normal(jax.random.PRNGKey(1), (1, B, latent), jnp.float32)
    mu1, sig21, theta1, z1 = jax.block_until_ready(
        iwae_forward(x, eps1, params, k=1))
    mu1_r, sig21_r, theta1_r, z1_r = iwae_reference(x, eps1, params, 1)
    np.testing.assert_allclose(np.asarray(theta1), np.asarray(theta1_r),
                               rtol=1e-2, atol=1e-2)
    np.testing.assert_allclose(np.asarray(z1), np.asarray(z1_r),
                               rtol=5e-3, atol=5e-3)
    assert theta1.shape == (B, in_features) and z1.shape == (B, latent)

    print("KERNEL_OK")
</pallas_src>

<mosaic_0001>
module attributes {stable_mosaic.version = 11 : i64} {
  func.func @iwae_kernel(%arg0: i32, %arg1: i32, %arg2: memref<128x256xbf16, #tpu.memory_space<vmem>>, %arg3: memref<1x128x128xbf16, #tpu.memory_space<vmem>>, %arg4: memref<256x128xbf16, #tpu.memory_space<vmem>>, %arg5: memref<1x128xf32, #tpu.memory_space<vmem>>, %arg6: memref<128x256xbf16, #tpu.memory_space<vmem>>, %arg7: memref<1x256xf32, #tpu.memory_space<vmem>>, %arg8: memref<128x128xbf16, #tpu.memory_space<vmem>>, %arg9: memref<1x128xf32, #tpu.memory_space<vmem>>, %arg10: memref<128x256xbf16, #tpu.memory_space<vmem>>, %arg11: memref<1x256xf32, #tpu.memory_space<vmem>>, %arg12: memref<128x128xf32, #tpu.memory_space<vmem>>, %arg13: memref<128x128xf32, #tpu.memory_space<vmem>>, %arg14: memref<1x128x256xbf16, #tpu.memory_space<vmem>>, %arg15: memref<1x128x128xf32, #tpu.memory_space<vmem>>, %arg16: memref<128x128xf32, #tpu.memory_space<vmem>>, %arg17: memref<128x128xf32, #tpu.memory_space<vmem>>) attributes {dimension_semantics = [#tpu.dimension_semantics<parallel>, #tpu.dimension_semantics<arbitrary>], iteration_bounds = array<i64: 1, 4>, scalar_prefetch = 0 : i64, scratch_operands = 2 : i64, tpu.core_type = #tpu.core_type<tc>, window_params = [{transform_indices = @transform_0, window_bounds = array<i64: 128, 256>}, {transform_indices = @transform_1, window_bounds = array<i64: 1, 128, 128>}, {pipeline_mode = #tpu.pipeline_mode<synchronous>, transform_indices = @transform_2, window_bounds = array<i64: 256, 128>}, {pipeline_mode = #tpu.pipeline_mode<synchronous>, transform_indices = @transform_3, window_bounds = array<i64: 1, 128>}, {pipeline_mode = #tpu.pipeline_mode<synchronous>, transform_indices = @transform_4, window_bounds = array<i64: 128, 256>}, {pipeline_mode = #tpu.pipeline_mode<synchronous>, transform_indices = @transform_5, window_bounds = array<i64: 1, 256>}, {pipeline_mode = #tpu.pipeline_mode<synchronous>, transform_indices = @transform_6, window_bounds = array<i64: 128, 128>}, {pipeline_mode = #tpu.pipeline_mode<synchronous>, transform_indices = @transform_7, window_bounds = array<i64: 1, 128>}, {pipeline_mode = #tpu.pipeline_mode<synchronous>, transform_indices = @transform_8, window_bounds = array<i64: 128, 256>}, {pipeline_mode = #tpu.pipeline_mode<synchronous>, transform_indices = @transform_9, window_bounds = array<i64: 1, 256>}, {transform_indices = @transform_10, window_bounds = array<i64: 128, 128>}, {transform_indices = @transform_11, window_bounds = array<i64: 128, 128>}, {transform_indices = @transform_12, window_bounds = array<i64: 1, 128, 256>}, {transform_indices = @transform_13, window_bounds = array<i64: 1, 128, 128>}]} {
    %c0_i32 = arith.constant 0 : i32
    %0 = arith.cmpi eq, %arg1, %c0_i32 : i32
    %1 = arith.extui %0 : i1 to i32
    %c0_i32_0 = arith.constant 0 : i32
    %2 = arith.cmpi ne, %1, %c0_i32_0 : i32
    scf.if %2 {
      %c0_23 = arith.constant 0 : index
      %c0_24 = arith.constant 0 : index
      %35 = vector.load %arg2[%c0_23, %c0_24] : memref<128x256xbf16, #tpu.memory_space<vmem>>, vector<128x256xbf16>
      %c0_25 = arith.constant 0 : index
      %c0_26 = arith.constant 0 : index
      %36 = vector.load %arg4[%c0_25, %c0_26] : memref<256x128xbf16, #tpu.memory_space<vmem>>, vector<256x128xbf16>
      %cst_27 = arith.constant dense<0.000000e+00> : vector<128x128xf32>
      %37 = tpu.matmul %35, %36, %cst_27 {dimension_numbers = #tpu.dot_dimension_numbers<[1], [0], [0], [1], [0, 0, 1, 1], [], []>} : vector<128x256xbf16>, vector<256x128xbf16>, vector<128x128xf32> -> vector<128x128xf32>
      %c0_28 = arith.constant 0 : index
      %c0_29 = arith.constant 0 : index
      %38 = vector.load %arg5[%c0_28, %c0_29] : memref<1x128xf32, #tpu.memory_space<vmem>>, vector<1x128xf32>
      %39 = vector.broadcast %38 : vector<1x128xf32> to vector<128x128xf32>
      %40 = arith.addf %37, %39 : vector<128x128xf32>
      %41 = math.tanh %40 : vector<128x128xf32>
      %42 = arith.truncf %41 : vector<128x128xf32> to vector<128x128xbf16>
      %c0_30 = arith.constant 0 : index
      %c0_31 = arith.constant 0 : index
      %43 = vector.load %arg6[%c0_30, %c0_31] : memref<128x256xbf16, #tpu.memory_space<vmem>>, vector<128x256xbf16>
      %cst_32 = arith.constant dense<0.000000e+00> : vector<128x256xf32>
      %44 = tpu.matmul %42, %43, %cst_32 {dimension_numbers = #tpu.dot_dimension_numbers<[1], [0], [0], [1], [0, 0, 1, 1], [], []>} : vector<128x128xbf16>, vector<128x256xbf16>, vector<128x256xf32> -> vector<128x256xf32>
      %c0_33 = arith.constant 0 : index
      %c0_34 = arith.constant 0 : index
      %45 = vector.load %arg7[%c0_33, %c0_34] : memref<1x256xf32, #tpu.memory_space<vmem>>, vector<1x256xf32>
      %46 = vector.broadcast %45 : vector<1x256xf32> to vector<128x256xf32>
      %47 = arith.addf %44, %46 : vector<128x256xf32>
      %48 = vector.extract_strided_slice %47 {offsets = [0, 0], sizes = [128, 128], strides = [1, 1]} : vector<128x256xf32> to vector<128x128xf32>
      %49 = vector.extract_strided_slice %47 {offsets = [0, 128], sizes = [128, 128], strides = [1, 1]} : vector<128x256xf32> to vector<128x128xf32>
      %cst_35 = arith.constant 0.000000e+00 : f32
      %50 = vector.broadcast %cst_35 : f32 to vector<128x128xf32>
      %51 = arith.maximumf %49, %50 : vector<128x128xf32>
      %52 = math.absf %49 : vector<128x128xf32>
      %cst_36 = arith.constant 0.000000e+00 : f32
      %53 = vector.broadcast %cst_36 : f32 to vector<128x128xf32>
      %54 = arith.subf %53, %52 : vector<128x128xf32>
      %55 = math.exp %54 : vector<128x128xf32>
      %56 = math.log1p %55 : vector<128x128xf32>
      %57 = arith.addf %51, %56 : vector<128x128xf32>
      %c0_37 = arith.constant 0 : index
      %c0_38 = arith.constant 0 : index
      %58 = vector.load %arg16[%c0_37, %c0_38] : memref<128x128xf32, #tpu.memory_space<vmem>>, vector<128x128xf32>
      tpu.vector_store %arg16[%c0_37, %c0_38], %48 {strides = array<i32>} : memref<128x128xf32, #tpu.memory_space<vmem>>, vector<128x128xf32>,
      %c0_39 = arith.constant 0 : index
      %c0_40 = arith.constant 0 : index
      %59 = vector.load %arg17[%c0_39, %c0_40] : memref<128x128xf32, #tpu.memory_space<vmem>>, vector<128x128xf32>
      tpu.vector_store %arg17[%c0_39, %c0_40], %57 {strides = array<i32>} : memref<128x128xf32, #tpu.memory_space<vmem>>, vector<128x128xf32>,
      %c0_41 = arith.constant 0 : index
      %c0_42 = arith.constant 0 : index
      %60 = vector.load %arg12[%c0_41, %c0_42] : memref<128x128xf32, #tpu.memory_space<vmem>>, vector<128x128xf32>
      tpu.vector_store %arg12[%c0_41, %c0_42], %48 {strides = array<i32>} : memref<128x128xf32, #tpu.memory_space<vmem>>, vector<128x128xf32>,
      %c0_43 = arith.constant 0 : index
      %c0_44 = arith.constant 0 : index
      %61 = vector.load %arg13[%c0_43, %c0_44] : memref<128x128xf32, #tpu.memory_space<vmem>>, vector<128x128xf32>
      tpu.vector_store %arg13[%c0_43, %c0_44], %57 {strides = array<i32>} : memref<128x128xf32, #tpu.memory_space<vmem>>, vector<128x128xf32>,
    } else {
    }
    %c0 = arith.constant 0 : index
    %c0_1 = arith.constant 0 : index
    %3 = vector.load %arg16[%c0, %c0_1] : memref<128x128xf32, #tpu.memory_space<vmem>>, vector<128x128xf32>
    %c0_2 = arith.constant 0 : index
    %c0_3 = arith.constant 0 : index
    %4 = vector.load %arg17[%c0_2, %c0_3] : memref<128x128xf32, #tpu.memory_space<vmem>>, vector<128x128xf32>
    %c0_4 = arith.constant 0 : index
    %c0_5 = arith.constant 0 : index
    %c0_6 = arith.constant 0 : index
    %5 = vector.load %arg3[%c0_4, %c0_5, %c0_6] : memref<1x128x128xbf16, #tpu.memory_space<vmem>>, vector<1x128x128xbf16>
    %6 = vector.shape_cast %5 : vector<1x128x128xbf16> to vector<128x128xbf16>
    %7 = arith.extf %6 : vector<128x128xbf16> to vector<128x128xf32>
    %8 = arith.mulf %4, %7 : vector<128x128xf32>
    %9 = arith.addf %3, %8 : vector<128x128xf32>
    %c0_7 = arith.constant 0 : index
    %c0_8 = arith.constant 0 : index
    %c0_9 = arith.constant 0 : index
    %10 = vector.load %arg15[%c0_7, %c0_8, %c0_9] : memref<1x128x128xf32, #tpu.memory_space<vmem>>, vector<1x128x128xf32>
    %11 = vector.shape_cast %10 : vector<1x128x128xf32> to vector<128x128xf32>
    %12 = vector.shape_cast %9 : vector<128x128xf32> to vector<1x128x128xf32>
    tpu.vector_store %arg15[%c0_7, %c0_8, %c0_9], %12 {strides = array<i32>} : memref<1x128x128xf32, #tpu.memory_space<vmem>>, vector<1x128x128xf32>,
    %13 = arith.truncf %9 : vector<128x128xf32> to vector<128x128xbf16>
    %c0_10 = arith.constant 0 : index
    %c0_11 = arith.constant 0 : index
    %14 = vector.load %arg8[%c0_10, %c0_11] : memref<128x128xbf16, #tpu.memory_space<vmem>>, vector<128x128xbf16>
    %cst = arith.constant dense<0.000000e+00> : vector<128x128xf32>
    %15 = tpu.matmul %13, %14, %cst {dimension_numbers = #tpu.dot_dimension_numbers<[1], [0], [0], [1], [0, 0, 1, 1], [], []>} : vector<128x128xbf16>, vector<128x128xbf16>, vector<128x128xf32> -> vector<128x128xf32>
    %c0_12 = arith.constant 0 : index
    %c0_13 = arith.constant 0 : index
    %16 = vector.load %arg9[%c0_12, %c0_13] : memref<1x128xf32, #tpu.memory_space<vmem>>, vector<1x128xf32>
    %17 = vector.broadcast %16 : vector<1x128xf32> to vector<128x128xf32>
    %18 = arith.addf %15, %17 : vector<128x128xf32>
    %19 = math.tanh %18 : vector<128x128xf32>
    %20 = arith.truncf %19 : vector<128x128xf32> to vector<128x128xbf16>
    %c0_14 = arith.constant 0 : index
    %c0_15 = arith.constant 0 : index
    %21 = vector.load %arg10[%c0_14, %c0_15] : memref<128x256xbf16, #tpu.memory_space<vmem>>, vector<128x256xbf16>
    %cst_16 = arith.constant dense<0.000000e+00> : vector<128x256xf32>
    %22 = tpu.matmul %20, %21, %cst_16 {dimension_numbers = #tpu.dot_dimension_numbers<[1], [0], [0], [1], [0, 0, 1, 1], [], []>} : vector<128x128xbf16>, vector<128x256xbf16>, vector<128x256xf32> -> vector<128x256xf32>
    %c0_17 = arith.constant 0 : index
    %c0_18 = arith.constant 0 : index
    %23 = vector.load %arg11[%c0_17, %c0_18] : memref<1x256xf32, #tpu.memory_space<vmem>>, vector<1x256xf32>
    %24 = vector.broadcast %23 : vector<1x256xf32> to vector<128x256xf32>
    %25 = arith.addf %22, %24 : vector<128x256xf32>
    %26 = arith.negf %25 : vector<128x256xf32>
    %27 = math.exp %26 : vector<128x256xf32>
    %cst_19 = arith.constant 1.000000e+00 : f32
    %28 = vector.broadcast %cst_19 : f32 to vector<128x256xf32>
    %29 = arith.addf %28, %27 : vector<128x256xf32>
    %30 = arith.divf %28, %29 : vector<128x256xf32>
    %31 = arith.truncf %30 : vector<128x256xf32> to vector<128x256xbf16>
    %c0_20 = arith.constant 0 : index
    %c0_21 = arith.constant 0 : index
    %c0_22 = arith.constant 0 : index
    %32 = vector.load %arg14[%c0_20, %c0_21, %c0_22] : memref<1x128x256xbf16, #tpu.memory_space<vmem>>, vector<1x128x256xbf16>
    %33 = vector.shape_cast %32 : vector<1x128x256xbf16> to vector<128x256xbf16>
    %34 = vector.shape_cast %31 : vector<128x256xbf16> to vector<1x128x256xbf16>
    tpu.vector_store %arg14[%c0_20, %c0_21, %c0_22], %34 {strides = array<i32>} : memref<1x128x256xbf16, #tpu.memory_space<vmem>>, vector<1x128x256xbf16>,
    return
  }
  func.func @transform_0(%arg0: i32, %arg1: i32) -> (i32, i32) {
    %c0_i32 = arith.constant 0 : i32
    %c0_i32_0 = arith.constant 0 : i32
    return %arg0, %c0_i32 : i32, i32
  }
  func.func @transform_1(%arg0: i32, %arg1: i32) -> (i32, i32, i32) {
    %c0_i32 = arith.constant 0 : i32
    %c0_i32_0 = arith.constant 0 : i32
    return %arg1, %arg0, %c0_i32 : i32, i32, i32
  }
  func.func @transform_2(%arg0: i32, %arg1: i32) -> (i32, i32) {
    %c0_i32 = arith.constant 0 : i32
    %c0_i32_0 = arith.constant 0 : i32
    %c0_i32_1 = arith.constant 0 : i32
    return %c0_i32, %c0_i32_0 : i32, i32
  }
  func.func @transform_3(%arg0: i32, %arg1: i32) -> (i32, i32) {
    %c0_i32 = arith.constant 0 : i32
    %c0_i32_0 = arith.constant 0 : i32
    %c0_i32_1 = arith.constant 0 : i32
    return %c0_i32, %c0_i32_0 : i32, i32
  }
  func.func @transform_4(%arg0: i32, %arg1: i32) -> (i32, i32) {
    %c0_i32 = arith.constant 0 : i32
    %c0_i32_0 = arith.constant 0 : i32
    %c0_i32_1 = arith.constant 0 : i32
    return %c0_i32, %c0_i32_0 : i32, i32
  }
  func.func @transform_5(%arg0: i32, %arg1: i32) -> (i32, i32) {
    %c0_i32 = arith.constant 0 : i32
    %c0_i32_0 = arith.constant 0 : i32
    %c0_i32_1 = arith.constant 0 : i32
    return %c0_i32, %c0_i32_0 : i32, i32
  }
  func.func @transform_6(%arg0: i32, %arg1: i32) -> (i32, i32) {
    %c0_i32 = arith.constant 0 : i32
    %c0_i32_0 = arith.constant 0 : i32
    %c0_i32_1 = arith.constant 0 : i32
    return %c0_i32, %c0_i32_0 : i32, i32
  }
  func.func @transform_7(%arg0: i32, %arg1: i32) -> (i32, i32) {
    %c0_i32 = arith.constant 0 : i32
    %c0_i32_0 = arith.constant 0 : i32
    %c0_i32_1 = arith.constant 0 : i32
    return %c0_i32, %c0_i32_0 : i32, i32
  }
  func.func @transform_8(%arg0: i32, %arg1: i32) -> (i32, i32) {
    %c0_i32 = arith.constant 0 : i32
    %c0_i32_0 = arith.constant 0 : i32
    %c0_i32_1 = arith.constant 0 : i32
    return %c0_i32, %c0_i32_0 : i32, i32
  }
  func.func @transform_9(%arg0: i32, %arg1: i32) -> (i32, i32) {
    %c0_i32 = arith.constant 0 : i32
    %c0_i32_0 = arith.constant 0 : i32
    %c0_i32_1 = arith.constant 0 : i32
    return %c0_i32, %c0_i32_0 : i32, i32
  }
  func.func @transform_10(%arg0: i32, %arg1: i32) -> (i32, i32) {
    %c0_i32 = arith.constant 0 : i32
    %c0_i32_0 = arith.constant 0 : i32
    return %arg0, %c0_i32 : i32, i32
  }
  func.func @transform_11(%arg0: i32, %arg1: i32) -> (i32, i32) {
    %c0_i32 = arith.constant 0 : i32
    %c0_i32_0 = arith.constant 0 : i32
    return %arg0, %c0_i32 : i32, i32
  }
  func.func @transform_12(%arg0: i32, %arg1: i32) -> (i32, i32, i32) {
    %c0_i32 = arith.constant 0 : i32
    %c0_i32_0 = arith.constant 0 : i32
    return %arg1, %arg0, %c0_i32 : i32, i32, i32
  }
  func.func @transform_13(%arg0: i32, %arg1: i32) -> (i32, i32, i32) {
    %c0_i32 = arith.constant 0 : i32
    %c0_i32_0 = arith.constant 0 : i32
    return %arg1, %arg0, %c0_i32 : i32, i32, i32
  }
}

</mosaic_0001>

<llo_original>
// kernel: iwae_forward.1
$region0: #{iwae_forward.1}
  #allocation0 [shape = 'u32[]', space=smem, size = 0x4, offset = 0x4, fixed_abs, tag = 'smem constant byte address 0x4 - core index']
  #allocation1 [shape = 'u32[144,128]{1,0:T(1,128)}', space=vmem, size = 0x12000, scoped, tag = 'internal scratch']
  #allocation2 [shape = 'f32[128,128]{1,0:T(8,128)}', space=vmem, size = 0x10000, scoped, tag = 'scratch operand']
  #allocation3 [shape = 'f32[128,128]{1,0:T(8,128)}', space=vmem, size = 0x10000, scoped, tag = 'scratch operand']
  %s0 = inlined_call_operand.hbm [shape: bf16[128,256], index: 0, kind: input, shape index: {}]
  %s1 = inlined_call_operand.hbm [shape: bf16[4,128,128], index: 1, kind: input, shape index: {}]
  %s2 = inlined_call_operand.hbm [shape: bf16[256,128], index: 2, kind: input, shape index: {}]
  %s3 = inlined_call_operand.hbm [shape: f32[1,128], index: 3, kind: input, shape index: {}]
  %s4 = inlined_call_operand.hbm [shape: bf16[128,256], index: 4, kind: input, shape index: {}]
  %s5 = inlined_call_operand.hbm [shape: f32[1,256], index: 5, kind: input, shape index: {}]
  %s6 = inlined_call_operand.hbm [shape: bf16[128,128], index: 6, kind: input, shape index: {}]
  %s7 = inlined_call_operand.hbm [shape: f32[1,128], index: 7, kind: input, shape index: {}]
  %s8 = inlined_call_operand.hbm [shape: bf16[128,256], index: 8, kind: input, shape index: {}]
  %s9 = inlined_call_operand.hbm [shape: f32[1,256], index: 9, kind: input, shape index: {}]
  %s10 = inlined_call_operand.hbm [shape: f32[128,128], index: 10, kind: output, shape index: {0}]
  %s11 = inlined_call_operand.hbm [shape: f32[128,128], index: 11, kind: output, shape index: {1}]
  %s12 = inlined_call_operand.hbm [shape: bf16[4,128,256], index: 12, kind: output, shape index: {2}]
  %s13 = inlined_call_operand.hbm [shape: f32[4,128,128], index: 13, kind: output, shape index: {3}]
  %14 = xla_tuple %s10, %s11, %s12, %s13
  %s15 = sld [smem:[#allocation0]]
  $region141: #{iwae_forward.1} parent=0
    _
  %s17 = ssub.s32 1, %s15
  %s18 = scalar_select 0, %s17, %s15
  $region1: #{iwae_forward.1} parent=0
    #allocation4 [shape = 'u8[65536]{0}', space=vmem, size = 0x10000, scoped, tag = 'input window, operand 0, single buffered']
    #allocation5 [shape = 's32[2]{0}', space=sflag, size = 0x8, scoped, tag = 'scoped memory for iwae_forward.1']
    #allocation6 [shape = 's32[2]{0}', space=sflag, size = 0x8, scoped, tag = 'scoped memory for iwae_forward.1']
    #allocation7 [shape = 'u8[65536]{0}', space=vmem, size = 0x10000, scoped, tag = 'input window, operand 1']
    #allocation8 [shape = 's32[2]{0}', space=sflag, size = 0x8, scoped, tag = 'scoped memory for iwae_forward.1']
    #allocation9 [shape = 'u8[65536]{0}', space=vmem, size = 0x10000, scoped, tag = 'input window, operand 2, single buffered']
    #allocation10 [shape = 'u8[512]{0}', space=vmem, size = 0x400, scoped, tag = 'input window, operand 3, single buffered']
    #allocation11 [shape = 's32[1]{0}', space=sflag, size = 0x4, scoped, tag = 'scoped memory for iwae_forward.1']
    #allocation12 [shape = 'u8[65536]{0}', space=vmem, size = 0x10000, scoped, tag = 'input window, operand 4, single buffered']
    #allocation13 [shape = 'u8[1024]{0}', space=vmem, size = 0x400, scoped, tag = 'input window, operand 5, single buffered']
    #allocation14 [shape = 's32[1]{0}', space=sflag, size = 0x4, scoped, tag = 'scoped memory for iwae_forward.1']
    #allocation15 [shape = 'u8[32768]{0}', space=vmem, size = 0x8000, scoped, tag = 'input window, operand 6, single buffered']
    #allocation16 [shape = 'u8[512]{0}', space=vmem, size = 0x400, scoped, tag = 'input window, operand 7, single buffered']
    #allocation17 [shape = 's32[1]{0}', space=sflag, size = 0x4, scoped, tag = 'scoped memory for iwae_forward.1']
    #allocation18 [shape = 'u8[65536]{0}', space=vmem, size = 0x10000, scoped, tag = 'input window, operand 8, single buffered']
    #allocation19 [shape = 'u8[1024]{0}', space=vmem, size = 0x400, scoped, tag = 'input window, operand 9, single buffered']
    #allocation20 [shape = 's32[1]{0}', space=sflag, size = 0x4, scoped, tag = 'scoped memory for iwae_forward.1']
    #allocation21 [shape = 'u8[65536]{0}', space=vmem, size = 0x10000, scoped, tag = 'output window, operand 0, single buffered']
    #allocation22 [shape = 'u8[65536]{0}', space=vmem, size = 0x10000, scoped, tag = 'output window, operand 1, single buffered']
    #allocation23 [shape = 's32[1]{0}', space=sflag, size = 0x4, scoped, tag = 'scoped memory for iwae_forward.1']
    #allocation24 [shape = 'u8[131072]{0}', space=vmem, size = 0x20000, scoped, tag = 'output window, operand 2']
    #allocation25 [shape = 'u8[131072]{0}', space=vmem, size = 0x20000, scoped, tag = 'output window, operand 3']
    %19 = vsyncpa [#allocation5], 0
    %20 = vsyncpa [#allocation8], 0
    %s21 = scalar_lea.sflag [#allocation8], 1
    %22 = vsyncpa %s21, 0
    %23 = vsyncpa [#allocation11], 0
    %24 = vsyncpa [#allocation14], 0
    %25 = vsyncpa [#allocation17], 0
    %26 = vsyncpa [#allocation20], 0
    %27 = vsyncpa [#allocation6], 0
    %28 = vsyncpa [#allocation23], 0
    loop: start=0, step=1, limit=6
    $region2: #{iwae_forward.1} parent=1 // loop_pre_header
      _
    $region3: #{iwae_forward.1} parent=1 // loop_header
      %s30 = sphi 0, %s34
      %p31 = scmp.ge.s32.totalorder %s30, 6
      %s37 = sphi 0, %s49
      %s38 = sphi 0, %s45
      %s39 = sphi 0, %s37
      %s40 = sphi 0, %s38
      %s41 = sphi 0, %s39
      %s42 = sphi 0, %s40
      %s52 = sphi 0, %s54
      %s55 = sphi 0, %s52
      %s56 = sphi 0, %s55
      %s72 = sphi 0, %s56
      %s80 = sphi 0, %s82
      %s83 = sphi 0, %s80
      %s84 = sphi 0, %s83
      %s100 = sphi 0, %s84
      %s104 = sphi 0, %s104
      %s106 = sphi 0, %s104
      %s107 = sphi 0, %s106
      %s121 = sphi 0, %s107
      %s125 = sphi 0, %s125
      %s127 = sphi 0, %s125
      %s128 = sphi 0, %s127
      %s142 = sphi 0, %s128
      %s146 = sphi 0, %s146
      %s148 = sphi 0, %s146
      %s149 = sphi 0, %s148
      %s163 = sphi 0, %s149
      %s167 = sphi 0, %s167
      %s169 = sphi 0, %s167
      %s170 = sphi 0, %s169
      %s184 = sphi 0, %s170
      %s188 = sphi 0, %s188
      %s190 = sphi 0, %s188
      %s191 = sphi 0, %s190
      %s205 = sphi 0, %s191
      %s209 = sphi 0, %s209
      %s211 = sphi 0, %s209
      %s212 = sphi 0, %s211
      %s226 = sphi 0, %s212
      %s230 = sphi 0, %s230
      %s232 = sphi 0, %s230
      %s233 = sphi 0, %s232
      %s247 = sphi 0, %s233
      %s251 = sphi 0, %s251
      %s253 = sphi 0, %s251
      %s254 = sphi 0, %s253
      %s268 = sphi 0, %s254
      %s274 = sphi 0, %s276
      %s277 = sphi 0, %s274
      %s278 = sphi 0, %s277
      %s294 = sphi 0, %s278
      %s300 = sphi 0, %s302
      %s303 = sphi 0, %s300
      %s304 = sphi 0, %s303
      %s320 = sphi 0, %s304
      %s328 = sphi 0, %s330
      %s331 = sphi 0, %s328
      %s332 = sphi 0, %s331
      %s348 = sphi 0, %s332
      %s356 = sphi 0, %s358
      %s359 = sphi 0, %s356
      %s360 = sphi 0, %s359
      %s376 = sphi 0, %s360
    $region4: #{iwae_forward.1} parent=1 // loop_header_branch
      %33 = sbr.rel (%p31) target = $region8
    $region5: #{iwae_forward.1} parent=1 // loop_body
      %s35 = ssub.s32 %s30, 1
      %s36 = ssub.s32 %s30, 2
      %s43 = sadd.s32 1, %s38
      %p44 = scmp.ge.s32.totalorder %s43, 4
      %s45 = scalar_select %p44, 0, %s43
      %s46 = sadd.s32 1, %s37
      %s47 = scalar_select %p44, %s46, %s37
      %p48 = scmp.ge.s32.totalorder %s47, 1
      %s49 = scalar_select %p48, 0, %s47
      %s50 = ssub.s32 %s37, %s49
      %p51 = scmp.eq.s32.totalorder %s50, 0
      %s53 = sadd.s32 %s52, 1
      %s54 = scalar_select %p51, %s52, %s53
      %p57 = pneg %p51
      %p58 = scmp.eq.s32.totalorder %s30, 3
      %p59 = por %p57, %p58
      %p60 = scmp.ne.s32.totalorder %s52, %s55
      %p61 = scmp.eq.s32.totalorder %s30, 0
      %p62 = por %p60, %p61
      %p63 = scmp.ne.s32.totalorder %s52, %s55
      %p64 = scmp.eq.s32.totalorder %s35, 3
      %p65 = por %p63, %p64
      %p66 = scmp.ne.s32.totalorder %s55, %s56
      %p67 = scmp.eq.s32.totalorder %s35, 0
      %p68 = por %p66, %p67
      %p69 = scmp.ne.s32.totalorder %s55, %s56
      %p70 = scmp.eq.s32.totalorder %s36, 3
      %p71 = por %p69, %p70
      %p73 = scmp.ne.s32.totalorder %s56, %s72
      %p74 = scmp.eq.s32.totalorder %s36, 0
      %p75 = por %p73, %p74
      %s76 = ssub.s32 %s38, %s45
      %s77 = ssub.s32 %s37, %s49
      %s78 = sor.u32 %s76, %s77
      %p79 = scmp.eq.s32.totalorder %s78, 0
      %s81 = sadd.s32 %s80, 1
      %s82 = scalar_select %p79, %s80, %s81
      %p85 = pneg %p79
      %p86 = scmp.eq.s32.totalorder %s30, 3
      %p87 = por %p85, %p86
      %p88 = scmp.ne.s32.totalorder %s80, %s83
      %p89 = scmp.eq.s32.totalorder %s30, 0
      %p90 = por %p88, %p89
      %p91 = scmp.ne.s32.totalorder %s80, %s83
      %p92 = scmp.eq.s32.totalorder %s35, 3
      %p93 = por %p91, %p92
      %p94 = scmp.ne.s32.totalorder %s83, %s84
      %p95 = scmp.eq.s32.totalorder %s35, 0
      %p96 = por %p94, %p95
      %p97 = scmp.ne.s32.totalorder %s83, %s84
      %p98 = scmp.eq.s32.totalorder %s36, 3
      %p99 = por %p97, %p98
      %p101 = scmp.ne.s32.totalorder %s84, %s100
      %p102 = scmp.eq.s32.totalorder %s36, 0
      %p103 = por %p101, %p102
      %s105 = sadd.s32 %s104, 1
      %p108 = scmp.eq.s32.totalorder %s30, 3
      %p109 = scmp.ne.s32.totalorder %s104, %s106
      %p110 = scmp.eq.s32.totalorder %s30, 0
      %p111 = por %p109, %p110
      %p112 = scmp.ne.s32.totalorder %s104, %s106
      %p113 = scmp.eq.s32.totalorder %s35, 3
      %p114 = por %p112, %p113
      %p115 = scmp.ne.s32.totalorder %s106, %s107
      %p116 = scmp.eq.s32.totalorder %s35, 0
      %p117 = por %p115, %p116
      %p118 = scmp.ne.s32.totalorder %s106, %s107
      %p119 = scmp.eq.s32.totalorder %s36, 3
      %p120 = por %p118, %p119
      %p122 = scmp.ne.s32.totalorder %s107, %s121
      %p123 = scmp.eq.s32.totalorder %s36, 0
      %p124 = por %p122, %p123
      %s126 = sadd.s32 %s125, 1
      %p129 = scmp.eq.s32.totalorder %s30, 3
      %p130 = scmp.ne.s32.totalorder %s125, %s127
      %p131 = scmp.eq.s32.totalorder %s30, 0
      %p132 = por %p130, %p131
      %p133 = scmp.ne.s32.totalorder %s125, %s127
      %p134 = scmp.eq.s32.totalorder %s35, 3
      %p135 = por %p133, %p134
      %p136 = scmp.ne.s32.totalorder %s127, %s128
      %p137 = scmp.eq.s32.totalorder %s35, 0
      %p138 = por %p136, %p137
      %p139 = scmp.ne.s32.totalorder %s127, %s128
      %p140 = scmp.eq.s32.totalorder %s36, 3
      %p141 = por %p139, %p140
      %p143 = scmp.ne.s32.totalorder %s128, %s142
      %p144 = scmp.eq.s32.totalorder %s36, 0
      %p145 = por %p143, %p144
      %s147 = sadd.s32 %s146, 1
      %p150 = scmp.eq.s32.totalorder %s30, 3
      %p151 = scmp.ne.s32.totalorder %s146, %s148
      %p152 = scmp.eq.s32.totalorder %s30, 0
      %p153 = por %p151, %p152
      %p154 = scmp.ne.s32.totalorder %s146, %s148
      %p155 = scmp.eq.s32.totalorder %s35, 3
      %p156 = por %p154, %p155
      %p157 = scmp.ne.s32.totalorder %s148, %s149
      %p158 = scmp.eq.s32.totalorder %s35, 0
      %p159 = por %p157, %p158
      %p160 = scmp.ne.s32.totalorder %s148, %s149
      %p161 = scmp.eq.s32.totalorder %s36, 3
      %p162 = por %p160, %p161
      %p164 = scmp.ne.s32.totalorder %s149, %s163
      %p165 = scmp.eq.s32.totalorder %s36, 0
      %p166 = por %p164, %p165
      %s168 = sadd.s32 %s167, 1
      %p171 = scmp.eq.s32.totalorder %s30, 3
      %p172 = scmp.ne.s32.totalorder %s167, %s169
      %p173 = scmp.eq.s32.totalorder %s30, 0
      %p174 = por %p172, %p173
      %p175 = scmp.ne.s32.totalorder %s167, %s169
      %p176 = scmp.eq.s32.totalorder %s35, 3
      %p177 = por %p175, %p176
      %p178 = scmp.ne.s32.totalorder %s169, %s170
      %p179 = scmp.eq.s32.totalorder %s35, 0
      %p180 = por %p178, %p179
      %p181 = scmp.ne.s32.totalorder %s169, %s170
      %p182 = scmp.eq.s32.totalorder %s36, 3
      %p183 = por %p181, %p182
      %p185 = scmp.ne.s32.totalorder %s170, %s184
      %p186 = scmp.eq.s32.totalorder %s36, 0
      %p187 = por %p185, %p186
      %s189 = sadd.s32 %s188, 1
      %p192 = scmp.eq.s32.totalorder %s30, 3
      %p193 = scmp.ne.s32.totalorder %s188, %s190
      %p194 = scmp.eq.s32.totalorder %s30, 0
      %p195 = por %p193, %p194
      %p196 = scmp.ne.s32.totalorder %s188, %s190
      %p197 = scmp.eq.s32.totalorder %s35, 3
      %p198 = por %p196, %p197
      %p199 = scmp.ne.s32.totalorder %s190, %s191
      %p200 = scmp.eq.s32.totalorder %s35, 0
      %p201 = por %p199, %p200
      %p202 = scmp.ne.s32.totalorder %s190, %s191
      %p203 = scmp.eq.s32.totalorder %s36, 3
      %p204 = por %p202, %p203
      %p206 = scmp.ne.s32.totalorder %s191, %s205
      %p207 = scmp.eq.s32.totalorder %s36, 0
      %p208 = por %p206, %p207
      %s210 = sadd.s32 %s209, 1
      %p213 = scmp.eq.s32.totalorder %s30, 3
      %p214 = scmp.ne.s32.totalorder %s209, %s211
      %p215 = scmp.eq.s32.totalorder %s30, 0
      %p216 = por %p214, %p215
      %p217 = scmp.ne.s32.totalorder %s209, %s211
      %p218 = scmp.eq.s32.totalorder %s35, 3
      %p219 = por %p217, %p218
      %p220 = scmp.ne.s32.totalorder %s211, %s212
      %p221 = scmp.eq.s32.totalorder %s35, 0
      %p222 = por %p220, %p221
      %p223 = scmp.ne.s32.totalorder %s211, %s212
      %p224 = scmp.eq.s32.totalorder %s36, 3
      %p225 = por %p223, %p224
      %p227 = scmp.ne.s32.totalorder %s212, %s226
      %p228 = scmp.eq.s32.totalorder %s36, 0
      %p229 = por %p227, %p228
      %s231 = sadd.s32 %s230, 1
      %p234 = scmp.eq.s32.totalorder %s30, 3
      %p235 = scmp.ne.s32.totalorder %s230, %s232
      %p236 = scmp.eq.s32.totalorder %s30, 0
      %p237 = por %p235, %p236
      %p238 = scmp.ne.s32.totalorder %s230, %s232
      %p239 = scmp.eq.s32.totalorder %s35, 3
      %p240 = por %p238, %p239
      %p241 = scmp.ne.s32.totalorder %s232, %s233
      %p242 = scmp.eq.s32.totalorder %s35, 0
      %p243 = por %p241, %p242
      %p244 = scmp.ne.s32.totalorder %s232, %s233
      %p245 = scmp.eq.s32.totalorder %s36, 3
      %p246 = por %p244, %p245
      %p248 = scmp.ne.s32.totalorder %s233, %s247
      %p249 = scmp.eq.s32.totalorder %s36, 0
      %p250 = por %p248, %p249
      %s252 = sadd.s32 %s251, 1
      %p255 = scmp.eq.s32.totalorder %s30, 3
      %p256 = scmp.ne.s32.totalorder %s251, %s253
      %p257 = scmp.eq.s32.totalorder %s30, 0
      %p258 = por %p256, %p257
      %p259 = scmp.ne.s32.totalorder %s251, %s253
      %p260 = scmp.eq.s32.totalorder %s35, 3
      %p261 = por %p259, %p260
      %p262 = scmp.ne.s32.totalorder %s253, %s254
      %p263 = scmp.eq.s32.totalorder %s35, 0
      %p264 = por %p262, %p263
      %p265 = scmp.ne.s32.totalorder %s253, %s254
      %p266 = scmp.eq.s32.totalorder %s36, 3
      %p267 = por %p265, %p266
      %p269 = scmp.ne.s32.totalorder %s254, %s268
      %p270 = scmp.eq.s32.totalorder %s36, 0
      %p271 = por %p269, %p270
      %s272 = ssub.s32 %s37, %s49
      %p273 = scmp.eq.s32.totalorder %s272, 0
      %s275 = sadd.s32 %s274, 1
      %s276 = scalar_select %p273, %s274, %s275
      %p279 = pneg %p273
      %p280 = scmp.eq.s32.totalorder %s30, 3
      %p281 = por %p279, %p280
      %p282 = scmp.ne.s32.totalorder %s274, %s277
      %p283 = scmp.eq.s32.totalorder %s30, 0
      %p284 = por %p282, %p283
      %p285 = scmp.ne.s32.totalorder %s274, %s277
      %p286 = scmp.eq.s32.totalorder %s35, 3
      %p287 = por %p285, %p286
      %p288 = scmp.ne.s32.totalorder %s277, %s278
      %p289 = scmp.eq.s32.totalorder %s35, 0
      %p290 = por %p288, %p289
      %p291 = scmp.ne.s32.totalorder %s277, %s278
      %p292 = scmp.eq.s32.totalorder %s36, 3
      %p293 = por %p291, %p292
      %p295 = scmp.ne.s32.totalorder %s278, %s294
      %p296 = scmp.eq.s32.totalorder %s36, 0
      %p297 = por %p295, %p296
      %s298 = ssub.s32 %s37, %s49
      %p299 = scmp.eq.s32.totalorder %s298, 0
      %s301 = sadd.s32 %s300, 1
      %s302 = scalar_select %p299, %s300, %s301
      %p305 = pneg %p299
      %p306 = scmp.eq.s32.totalorder %s30, 3
      %p307 = por %p305, %p306
      %p308 = scmp.ne.s32.totalorder %s300, %s303
      %p309 = scmp.eq.s32.totalorder %s30, 0
      %p310 = por %p308, %p309
      %p311 = scmp.ne.s32.totalorder %s300, %s303
      %p312 = scmp.eq.s32.totalorder %s35, 3
      %p313 = por %p311, %p312
      %p314 = scmp.ne.s32.totalorder %s303, %s304
      %p315 = scmp.eq.s32.totalorder %s35, 0
      %p316 = por %p314, %p315
      %p317 = scmp.ne.s32.totalorder %s303, %s304
      %p318 = scmp.eq.s32.totalorder %s36, 3
      %p319 = por %p317, %p318
      %p321 = scmp.ne.s32.totalorder %s304, %s320
      %p322 = scmp.eq.s32.totalorder %s36, 0
      %p323 = por %p321, %p322
      %s324 = ssub.s32 %s38, %s45
      %s325 = ssub.s32 %s37, %s49
      %s326 = sor.u32 %s324, %s325
      %p327 = scmp.eq.s32.totalorder %s326, 0
      %s329 = sadd.s32 %s328, 1
      %s330 = scalar_select %p327, %s328, %s329
      %p333 = pneg %p327
      %p334 = scmp.eq.s32.totalorder %s30, 3
      %p335 = por %p333, %p334
      %p336 = scmp.ne.s32.totalorder %s328, %s331
      %p337 = scmp.eq.s32.totalorder %s30, 0
      %p338 = por %p336, %p337
      %p339 = scmp.ne.s32.totalorder %s328, %s331
      %p340 = scmp.eq.s32.totalorder %s35, 3
      %p341 = por %p339, %p340
      %p342 = scmp.ne.s32.totalorder %s331, %s332
      %p343 = scmp.eq.s32.totalorder %s35, 0
      %p344 = por %p342, %p343
      %p345 = scmp.ne.s32.totalorder %s331, %s332
      %p346 = scmp.eq.s32.totalorder %s36, 3
      %p347 = por %p345, %p346
      %p349 = scmp.ne.s32.totalorder %s332, %s348
      %p350 = scmp.eq.s32.totalorder %s36, 0
      %p351 = por %p349, %p350
      %s352 = ssub.s32 %s38, %s45
      %s353 = ssub.s32 %s37, %s49
      %s354 = sor.u32 %s352, %s353
      %p355 = scmp.eq.s32.totalorder %s354, 0
      %s357 = sadd.s32 %s356, 1
      %s358 = scalar_select %p355, %s356, %s357
      %p361 = pneg %p355
      %p362 = scmp.eq.s32.totalorder %s30, 3
      %p363 = por %p361, %p362
      %p364 = scmp.ne.s32.totalorder %s356, %s359
      %p365 = scmp.eq.s32.totalorder %s30, 0
      %p366 = por %p364, %p365
      %p367 = scmp.ne.s32.totalorder %s356, %s359
      %p368 = scmp.eq.s32.totalorder %s35, 3
      %p369 = por %p367, %p368
      %p370 = scmp.ne.s32.totalorder %s359, %s360
      %p371 = scmp.eq.s32.totalorder %s35, 0
      %p372 = por %p370, %p371
      %p373 = scmp.ne.s32.totalorder %s359, %s360
      %p374 = scmp.eq.s32.totalorder %s36, 3
      %p375 = por %p373, %p374
      %p377 = scmp.ne.s32.totalorder %s360, %s376
      %p378 = scmp.eq.s32.totalorder %s36, 0
      %p379 = por %p377, %p378
      %p380 = scmp.le.s32.totalorder 1, %s30
      %p381 = scmp.lt.s32.totalorder %s30, 5
      %p382 = pnand %p380, %p381
      %p383 = pneg %p382
      // Predicated region
      $region9: #{iwae_forward.1} parent=5 // pred_check
        _
      $region10: #{iwae_forward.1} parent=5 // pred_check_branch
        %385 = sbr.rel (%p382) target = $region12
      $region11: #{iwae_forward.1} parent=5 // pred_region
        %s386 = ssub.s32 %s30, 1
        // Predicated region
        $region13: #{iwae_forward.1} parent=11 // pred_check
          %p387 = pneg %p68
        $region14: #{iwae_forward.1} parent=11 // pred_check_branch
          %389 = sbr.rel (%p387) target = $region16
        $region15: #{iwae_forward.1} parent=11 // pred_region
          %s390 = smul.u32 16, %s39
          %s392 = ssub.s32 2048, 2048
          %393 = vsyncadd [#allocation5], %s392
          %s394 = smul.addr %s390, 2
          %s395 = smul.addr %s394, 64
          %s396 = scalar_lea.hbm %s0, %s395
          %s397 = sshll.u32 [#allocation4], 4
          %s398 = int_to_ptr.vmem [resolvable:$true] %s397
          %403 = dma.hbm_to_vmem [thread:$0]  %s396, 2048, %s398, [#allocation5], 128, 128, 8
        $region16: #{iwae_forward.1} parent=11 // pred_fallthru
          _
        // Predicated region
        $region17: #{iwae_forward.1} parent=11 // pred_check
          %p404 = pneg %p117
        $region18: #{iwae_forward.1} parent=11 // pred_check_branch
          %406 = sbr.rel (%p404) target = $region20
        $region19: #{iwae_forward.1} parent=11 // pred_region
          %s408 = ssub.s32 2048, 2048
          %409 = vsyncadd [#allocation8], %s408
          %s410 = sshll.u32 [#allocation9], 4
          %s411 = int_to_ptr.vmem [resolvable:$true] %s410
          %416 = dma.hbm_to_vmem [thread:$0]  %s2, 2048, %s411, [#allocation8], 64, 64, 4
        $region20: #{iwae_forward.1} parent=11 // pred_fallthru
          _
        // Predicated region
        $region21: #{iwae_forward.1} parent=11 // pred_check
          %p417 = pneg %p138
        $region22: #{iwae_forward.1} parent=11 // pred_check_branch
          %419 = sbr.rel (%p417) target = $region24
        $region23: #{iwae_forward.1} parent=11 // pred_region
          %s421 = ssub.s32 16, 16
          %422 = vsyncadd [#allocation11], %s421
          %s424 = sshll.u32 [#allocation10], 4
          %s425 = int_to_ptr.vmem [resolvable:$true] %s424
          %427 = dma.hbm_to_vmem [thread:$0]  %s3, 16, %s425, [#allocation11]
        $region24: #{iwae_forward.1} parent=11 // pred_fallthru
          _
        // Predicated region
        $region25: #{iwae_forward.1} parent=11 // pred_check
          %p428 = pneg %p159
        $region26: #{iwae_forward.1} parent=11 // pred_check_branch
          %430 = sbr.rel (%p428) target = $region28
        $region27: #{iwae_forward.1} parent=11 // pred_region
          %s432 = ssub.s32 2048, 2048
          %433 = vsyncadd [#allocation11], %s432
          %s434 = sshll.u32 [#allocation12], 4
          %s435 = int_to_ptr.vmem [resolvable:$true] %s434
          %440 = dma.hbm_to_vmem [thread:$0]  %s4, 2048, %s435, [#allocation11], 128, 128, 8
        $region28: #{iwae_forward.1} parent=11 // pred_fallthru
          _
        // Predicated region
        $region29: #{iwae_forward.1} parent=11 // pred_check
          %p441 = pneg %p180
        $region30: #{iwae_forward.1} parent=11 // pred_check_branch
          %443 = sbr.rel (%p441) target = $region32
        $region31: #{iwae_forward.1} parent=11 // pred_region
          %s445 = ssub.s32 32, 32
          %446 = vsyncadd [#allocation14], %s445
          %s448 = sshll.u32 [#allocation13], 4
          %s449 = int_to_ptr.vmem [resolvable:$true] %s448
          %451 = dma.hbm_to_vmem [thread:$0]  %s5, 32, %s449, [#allocation14]
        $region32: #{iwae_forward.1} parent=11 // pred_fallthru
          _
        // Predicated region
        $region33: #{iwae_forward.1} parent=11 // pred_check
          %p452 = pneg %p201
        $region34: #{iwae_forward.1} parent=11 // pred_check_branch
          %454 = sbr.rel (%p452) target = $region36
        $region35: #{iwae_forward.1} parent=11 // pred_region
          %s456 = ssub.s32 1024, 1024
          %457 = vsyncadd [#allocation14], %s456
          %s458 = sshll.u32 [#allocation15], 4
          %s459 = int_to_ptr.vmem [resolvable:$true] %s458
          %464 = dma.hbm_to_vmem [thread:$0]  %s6, 1024, %s459, [#allocation14], 64, 64, 4
        $region36: #{iwae_forward.1} parent=11 // pred_fallthru
          _
        // Predicated region
        $region37: #{iwae_forward.1} parent=11 // pred_check
          %p465 = pneg %p222
        $region38: #{iwae_forward.1} parent=11 // pred_check_branch
          %467 = sbr.rel (%p465) target = $region40
        $region39: #{iwae_forward.1} parent=11 // pred_region
          %s469 = ssub.s32 16, 16
          %470 = vsyncadd [#allocation17], %s469
          %s472 = sshll.u32 [#allocation16], 4
          %s473 = int_to_ptr.vmem [resolvable:$true] %s472
          %475 = dma.hbm_to_vmem [thread:$0]  %s7, 16, %s473, [#allocation17]
        $region40: #{iwae_forward.1} parent=11 // pred_fallthru
          _
        // Predicated region
        $region41: #{iwae_forward.1} parent=11 // pred_check
          %p476 = pneg %p243
        $region42: #{iwae_forward.1} parent=11 // pred_check_branch
          %478 = sbr.rel (%p476) target = $region44
        $region43: #{iwae_forward.1} parent=11 // pred_region
          %s480 = ssub.s32 2048, 2048
          %481 = vsyncadd [#allocation17], %s480
          %s482 = sshll.u32 [#allocation18], 4
          %s483 = int_to_ptr.vmem [resolvable:$true] %s482
          %488 = dma.hbm_to_vmem [thread:$0]  %s8, 2048, %s483, [#allocation17], 128, 128, 8
        $region44: #{iwae_forward.1} parent=11 // pred_fallthru
          _
        // Predicated region
        $region45: #{iwae_forward.1} parent=11 // pred_check
          %p489 = pneg %p264
        $region46: #{iwae_forward.1} parent=11 // pred_check_branch
          %491 = sbr.rel (%p489) target = $region48
        $region47: #{iwae_forward.1} parent=11 // pred_region
          %s493 = ssub.s32 32, 32
          %494 = vsyncadd [#allocation20], %s493
          %s496 = sshll.u32 [#allocation19], 4
          %s497 = int_to_ptr.vmem [resolvable:$true] %s496
          %499 = dma.hbm_to_vmem [thread:$0]  %s9, 32, %s497, [#allocation20]
        $region48: #{iwae_forward.1} parent=11 // pred_fallthru
          _
      $region12: #{iwae_forward.1} parent=5 // pred_fallthru
        _
      %p500 = scmp.lt.s32.totalorder %s30, 4
      // Predicated region
      $region49: #{iwae_forward.1} parent=5 // pred_check
        %p501 = pneg %p500
      $region50: #{iwae_forward.1} parent=5 // pred_check_branch
        %503 = sbr.rel (%p501) target = $region52
      $region51: #{iwae_forward.1} parent=5 // pred_region
        // Predicated region
        $region53: #{iwae_forward.1} parent=51 // pred_check
          %p504 = pneg %p90
        $region54: #{iwae_forward.1} parent=51 // pred_check_branch
          %506 = sbr.rel (%p504) target = $region56
        $region55: #{iwae_forward.1} parent=51 // pred_region
          %s507 = sand.u32 %s30, 1
          %s508 = scalar_lea.sflag [#allocation8], %s507
          %s509 = sand.u32 %s80, 1
          %s510 = smul.addr %s509, 64
          %s511 = scalar_lea.vmem [#allocation7], %s510
          %s512 = smul.u32 16, %s37
          %s514 = ssub.s32 1024, 1024
          %515 = vsyncadd %s508, %s514
          %s516 = smul.addr %s38, 16
          %s517 = sadd.s32 %s512, %s516
          %s518 = smul.addr %s517, 64
          %s519 = scalar_lea.hbm %s1, %s518
          %s520 = sshll.u32 %s511, 4
          %s521 = int_to_ptr.vmem [resolvable:$true] %s520
          %526 = dma.hbm_to_vmem [thread:$0]  %s519, 1024, %s521, %s508, 64, 64, 4
        $region56: #{iwae_forward.1} parent=51 // pred_fallthru
          _
      $region52: #{iwae_forward.1} parent=5 // pred_fallthru
        _
      %p527 = scmp.le.s32.totalorder 1, %s30
      %p528 = scmp.lt.s32.totalorder %s30, 5
      %p529 = pnand %p527, %p528
      %p530 = pneg %p529
      // Predicated region
      $region57: #{iwae_forward.1} parent=5 // pred_check
        _
      $region58: #{iwae_forward.1} parent=5 // pred_check_branch
        %532 = sbr.rel (%p529) target = $region60
      $region59: #{iwae_forward.1} parent=5 // pred_region
        %s533 = ssub.s32 %s30, 1
        // Predicated region
        $region61: #{iwae_forward.1} parent=59 // pred_check
          %p534 = pneg %p68
        $region62: #{iwae_forward.1} parent=59 // pred_check_branch
          %536 = sbr.rel (%p534) target = $region64
        $region63: #{iwae_forward.1} parent=59 // pred_region
          %537 = dma.done [#allocation5], 2048
        $region64: #{iwae_forward.1} parent=59 // pred_fallthru
          _
        %s538 = sand.u32 %s35, 1
        %s539 = scalar_lea.sflag [#allocation8], %s538
        %s540 = sand.u32 %s83, 1
        %s541 = smul.addr %s540, 64
        %s542 = scalar_lea.vmem [#allocation7], %s541
        // Predicated region
        $region65: #{iwae_forward.1} parent=59 // pred_check
          %p543 = pneg %p96
        $region66: #{iwae_forward.1} parent=59 // pred_check_branch
          %545 = sbr.rel (%p543) target = $region68
        $region67: #{iwae_forward.1} parent=59 // pred_region
          %546 = dma.done %s539, 1024
        $region68: #{iwae_forward.1} parent=59 // pred_fallthru
          _
        // Predicated region
        $region69: #{iwae_forward.1} parent=59 // pred_check
          %p547 = pneg %p117
        $region70: #{iwae_forward.1} parent=59 // pred_check_branch
          %549 = sbr.rel (%p547) target = $region72
        $region71: #{iwae_forward.1} parent=59 // pred_region
          %550 = dma.done [#allocation8], 2048
        $region72: #{iwae_forward.1} parent=59 // pred_fallthru
          _
        // Predicated region
        $region73: #{iwae_forward.1} parent=59 // pred_check
          %p551 = pneg %p138
        $region74: #{iwae_forward.1} parent=59 // pred_check_branch
          %553 = sbr.rel (%p551) target = $region76
        $region75: #{iwae_forward.1} parent=59 // pred_region
          %554 = dma.done [#allocation11], 16
        $region76: #{iwae_forward.1} parent=59 // pred_fallthru
          _
        // Predicated region
        $region77: #{iwae_forward.1} parent=59 // pred_check
          %p555 = pneg %p159
        $region78: #{iwae_forward.1} parent=59 // pred_check_branch
          %557 = sbr.rel (%p555) target = $region80
        $region79: #{iwae_forward.1} parent=59 // pred_region
          %558 = dma.done [#allocation11], 2048
        $region80: #{iwae_forward.1} parent=59 // pred_fallthru
          _
        // Predicated region
        $region81: #{iwae_forward.1} parent=59 // pred_check
          %p559 = pneg %p180
        $region82: #{iwae_forward.1} parent=59 // pred_check_branch
          %561 = sbr.rel (%p559) target = $region84
        $region83: #{iwae_forward.1} parent=59 // pred_region
          %562 = dma.done [#allocation14], 32
        $region84: #{iwae_forward.1} parent=59 // pred_fallthru
          _
        // Predicated region
        $region85: #{iwae_forward.1} parent=59 // pred_check
          %p563 = pneg %p201
        $region86: #{iwae_forward.1} parent=59 // pred_check_branch
          %565 = sbr.rel (%p563) target = $region88
        $region87: #{iwae_forward.1} parent=59 // pred_region
          %566 = dma.done [#allocation14], 1024
        $region88: #{iwae_forward.1} parent=59 // pred_fallthru
          _
        // Predicated region
        $region89: #{iwae_forward.1} parent=59 // pred_check
          %p567 = pneg %p222
        $region90: #{iwae_forward.1} parent=59 // pred_check_branch
          %569 = sbr.rel (%p567) target = $region92
        $region91: #{iwae_forward.1} parent=59 // pred_region
          %570 = dma.done [#allocation17], 16
        $region92: #{iwae_forward.1} parent=59 // pred_fallthru
          _
        // Predicated region
        $region93: #{iwae_forward.1} parent=59 // pred_check
          %p571 = pneg %p243
        $region94: #{iwae_forward.1} parent=59 // pred_check_branch
          %573 = sbr.rel (%p571) target = $region96
        $region95: #{iwae_forward.1} parent=59 // pred_region
          %574 = dma.done [#allocation17], 2048
        $region96: #{iwae_forward.1} parent=59 // pred_fallthru
          _
        // Predicated region
        $region97: #{iwae_forward.1} parent=59 // pred_check
          %p575 = pneg %p264
        $region98: #{iwae_forward.1} parent=59 // pred_check_branch
          %577 = sbr.rel (%p575) target = $region100
        $region99: #{iwae_forward.1} parent=59 // pred_region
          %578 = dma.done [#allocation20], 32
        $region100: #{iwae_forward.1} parent=59 // pred_fallthru
          _
        %p579 = pneg %p68
        %p580 = pneg %p65
        %s581 = sand.u32 %s35, 1
        %s582 = scalar_lea.sflag [#allocation8], %s581
        %s583 = sand.u32 %s83, 1
        %s584 = smul.addr %s583, 64
        %s585 = scalar_lea.vmem [#allocation7], %s584
        %p586 = pneg %p96
        %p587 = pneg %p93
        %p588 = pneg %p117
        %p589 = pneg %p114
        %p590 = pneg %p138
        %p591 = pneg %p135
        %p592 = pneg %p159
        %p593 = pneg %p156
        %p594 = pneg %p180
        %p595 = pneg %p177
        %p596 = pneg %p201
        %p597 = pneg %p198
        %p598 = pneg %p222
        %p599 = pneg %p219
        %p600 = pneg %p243
        %p601 = pneg %p240
        %p602 = pneg %p264
        %p603 = pneg %p261
        %p604 = pneg %p290
        %p605 = pneg %p287
        %p606 = pneg %p316
        %p607 = pneg %p313
        %p608 = pneg %p344
        %p609 = pneg %p341
        %s610 = sand.u32 %s35, 1
        %s611 = scalar_lea.sflag [#allocation6], %s610
        %s612 = sand.u32 %s331, 1
        %s613 = smul.addr %s612, 128
        %s614 = scalar_lea.vmem [#allocation24], %s613
        %p615 = pneg %p372
        %p616 = pneg %p369
        %s617 = sand.u32 %s35, 1
        %s618 = scalar_lea.sflag [#allocation6], %s617
        %s619 = sand.u32 %s359, 1
        %s620 = smul.addr %s619, 128
        %s621 = scalar_lea.vmem [#allocation25], %s620
        %s622 = smul.u32 16, %s39
        %s623 = smul.u32 16, %s39
        %s624 = smul.u32 16, %s39
        %s625 = smul.u32 16, %s39
        %s626 = smul.u32 16, %s39
        %s627 = smul.u32 16, %s39
        %p629 = scmp.eq.s32.totalorder %s40, 0
        // Predicated region
        $region101: #{iwae_forward.1} parent=59 // pred_check
          %p630 = pneg %p629
        $region102: #{iwae_forward.1} parent=59 // pred_check_branch
          %632 = sbr.rel (%p630) target = $region104
        $region103: #{iwae_forward.1} parent=59 // pred_region
          %v633 = vld [vmem:[#allocation4] sm:$0xff]
          %v634 = vld [vmem:[#allocation4 + $0x8] sm:$0xff]
          %v635 = vld [vmem:[#allocation4 + $0x10] sm:$0xff]
          %v636 = vld [vmem:[#allocation4 + $0x18] sm:$0xff]
          %v637 = vld [vmem:[#allocation4 + $0x20] sm:$0xff]
          %v638 = vld [vmem:[#allocation4 + $0x28] sm:$0xff]
          %v639 = vld [vmem:[#allocation4 + $0x30] sm:$0xff]
          %v640 = vld [vmem:[#allocation4 + $0x38] sm:$0xff]
          %v641 = vld [vmem:[#allocation4 + $0x40] sm:$0xff]
          %v642 = vld [vmem:[#allocation4 + $0x48] sm:$0xff]
          %v643 = vld [vmem:[#allocation4 + $0x50] sm:$0xff]
          %v644 = vld [vmem:[#allocation4 + $0x58] sm:$0xff]
          %v645 = vld [vmem:[#allocation4 + $0x60] sm:$0xff]
          %v646 = vld [vmem:[#allocation4 + $0x68] sm:$0xff]
          %v647 = vld [vmem:[#allocation4 + $0x70] sm:$0xff]
          %v648 = vld [vmem:[#allocation4 + $0x78] sm:$0xff]
          %v649 = vld [vmem:[#allocation9] sm:$0xf]
          %v650 = vld [vmem:[#allocation9 + $0x4] sm:$0xf]
          %v651 = vld [vmem:[#allocation9 + $0x8] sm:$0xf]
          %v652 = vld [vmem:[#allocation9 + $0xc] sm:$0xf]
          %v653 = vld [vmem:[#allocation9 + $0x10] sm:$0xf]
          %v654 = vld [vmem:[#allocation9 + $0x14] sm:$0xf]
          %v655 = vld [vmem:[#allocation9 + $0x18] sm:$0xf]
          %v656 = vld [vmem:[#allocation9 + $0x1c] sm:$0xf]
          %v657 = vld [vmem:[#allocation9 + $0x20] sm:$0xf]
          %v658 = vld [vmem:[#allocation9 + $0x24] sm:$0xf]
          %v659 = vld [vmem:[#allocation9 + $0x28] sm:$0xf]
          %v660 = vld [vmem:[#allocation9 + $0x2c] sm:$0xf]
          %v661 = vld [vmem:[#allocation9 + $0x30] sm:$0xf]
          %v662 = vld [vmem:[#allocation9 + $0x34] sm:$0xf]
          %v663 = vld [vmem:[#allocation9 + $0x38] sm:$0xf]
          %v664 = vld [vmem:[#allocation9 + $0x3c] sm:$0xf]
          %v665 = vld [vmem:[#allocation9 + $0x40] sm:$0xf]
          %v666 = vld [vmem:[#allocation9 + $0x44] sm:$0xf]
          %v667 = vld [vmem:[#allocation9 + $0x48] sm:$0xf]
          %v668 = vld [vmem:[#allocation9 + $0x4c] sm:$0xf]
          %v669 = vld [vmem:[#allocation9 + $0x50] sm:$0xf]
          %v670 = vld [vmem:[#allocation9 + $0x54] sm:$0xf]
          %v671 = vld [vmem:[#allocation9 + $0x58] sm:$0xf]
          %v672 = vld [vmem:[#allocation9 + $0x5c] sm:$0xf]
          %v673 = vld [vmem:[#allocation9 + $0x60] sm:$0xf]
          %v674 = vld [vmem:[#allocation9 + $0x64] sm:$0xf]
          %v675 = vld [vmem:[#allocation9 + $0x68] sm:$0xf]
          %v676 = vld [vmem:[#allocation9 + $0x6c] sm:$0xf]
          %v677 = vld [vmem:[#allocation9 + $0x70] sm:$0xf]
          %v678 = vld [vmem:[#allocation9 + $0x74] sm:$0xf]
          %v679 = vld [vmem:[#allocation9 + $0x78] sm:$0xf]
          %v680 = vld [vmem:[#allocation9 + $0x7c] sm:$0xf]
          %v681 = vld [vmem:[#allocation10] sm:$0x1]
          %v683 = vlaneseq
          %v684 = vshrl.u32 %v683, 7
          %v685 = vsub.s32 0, %v684
          %v686 = vrot.slane %v681, %v685
          %v704 = vunpack.c.l.b16 %v633
          %v705 = vunpack.c.h.b16 %v633
          %v706 = vunpack.c.l.b16 %v634
          %v707 = vunpack.c.h.b16 %v634
          %v708 = vunpack.c.l.b16 %v635
          %v709 = vunpack.c.h.b16 %v635
          %v710 = vunpack.c.l.b16 %v636
          %v711 = vunpack.c.h.b16 %v636
          %v712 = vunpack.c.l.b16 %v637
          %v713 = vunpack.c.h.b16 %v637
          %v714 = vunpack.c.l.b16 %v638
          %v715 = vunpack.c.h.b16 %v638
          %v716 = vunpack.c.l.b16 %v639
          %v717 = vunpack.c.h.b16 %v639
          %v718 = vunpack.c.l.b16 %v640
          %v719 = vunpack.c.h.b16 %v640
          %v720 = vunpack.c.l.b16 %v641
          %v721 = vunpack.c.h.b16 %v641
          %v722 = vunpack.c.l.b16 %v642
          %v723 = vunpack.c.h.b16 %v642
          %v724 = vunpack.c.l.b16 %v643
          %v725 = vunpack.c.h.b16 %v643
          %v726 = vunpack.c.l.b16 %v644
          %v727 = vunpack.c.h.b16 %v644
          %v728 = vunpack.c.l.b16 %v645
          %v729 = vunpack.c.h.b16 %v645
          %v730 = vunpack.c.l.b16 %v646
          %v731 = vunpack.c.h.b16 %v646
          %v732 = vunpack.c.l.b16 %v647
          %v733 = vunpack.c.h.b16 %v647
          %v734 = vunpack.c.l.b16 %v648
          %v735 = vunpack.c.h.b16 %v648
          %v736 = vpack.c.b16 %v706, %v704
          %v737 = vpack.c.b16 %v707, %v705
          %v738 = vpack.c.b16 %v710, %v708
          %v739 = vpack.c.b16 %v711, %v709
          %v740 = vpack.c.b16 %v714, %v712
          %v741 = vpack.c.b16 %v715, %v713
          %v742 = vpack.c.b16 %v718, %v716
          %v743 = vpack.c.b16 %v719, %v717
          %v744 = vpack.c.b16 %v722, %v720
          %v745 = vpack.c.b16 %v723, %v721
          %v746 = vpack.c.b16 %v726, %v724
          %v747 = vpack.c.b16 %v727, %v725
          %v748 = vpack.c.b16 %v730, %v728
          %v749 = vpack.c.b16 %v731, %v729
          %v750 = vpack.c.b16 %v734, %v732
          %v751 = vpack.c.b16 %v735, %v733
          %v800 = vunpack.c.l.b16 %v649
          %v801 = vunpack.c.l.b16 %v650
          %v802 = vunpack.c.l.b16 %v651
          %v803 = vunpack.c.l.b16 %v652
          %v804 = vunpack.c.l.b16 %v653
          %v805 = vunpack.c.l.b16 %v654
          %v806 = vunpack.c.l.b16 %v655
          %v807 = vunpack.c.l.b16 %v656
          %v808 = vunpack.c.l.b16 %v657
          %v809 = vunpack.c.l.b16 %v658
          %v810 = vunpack.c.l.b16 %v659
          %v811 = vunpack.c.l.b16 %v660
          %v812 = vunpack.c.l.b16 %v661
          %v813 = vunpack.c.l.b16 %v662
          %v814 = vunpack.c.l.b16 %v663
          %v815 = vunpack.c.l.b16 %v664
          %v816 = vunpack.c.l.b16 %v665
          %v817 = vunpack.c.l.b16 %v666
          %v818 = vunpack.c.l.b16 %v667
          %v819 = vunpack.c.l.b16 %v668
          %v820 = vunpack.c.l.b16 %v669
          %v821 = vunpack.c.l.b16 %v670
          %v822 = vunpack.c.l.b16 %v671
          %v823 = vunpack.c.l.b16 %v672
          %v824 = vunpack.c.l.b16 %v673
          %v825 = vunpack.c.l.b16 %v674
          %v826 = vunpack.c.l.b16 %v675
          %v827 = vunpack.c.l.b16 %v676
          %v828 = vunpack.c.l.b16 %v677
          %v829 = vunpack.c.l.b16 %v678
          %v830 = vunpack.c.l.b16 %v679
          %v831 = vunpack.c.l.b16 %v680
          %v832 = vpack.c.b16 %v801, %v800
          %v833 = vpack.c.b16 %v803, %v802
          %v834 = vpack.c.b16 %v805, %v804
          %v835 = vpack.c.b16 %v807, %v806
          %v836 = vpack.c.b16 %v809, %v808
          %v837 = vpack.c.b16 %v811, %v810
          %v838 = vpack.c.b16 %v813, %v812
          %v839 = vpack.c.b16 %v815, %v814
          %v840 = vpack.c.b16 %v817, %v816
          %v841 = vpack.c.b16 %v819, %v818
          %v842 = vpack.c.b16 %v821, %v820
          %v843 = vpack.c.b16 %v823, %v822
          %v844 = vpack.c.b16 %v825, %v824
          %v845 = vpack.c.b16 %v827, %v826
          %v846 = vpack.c.b16 %v829, %v828
          %v847 = vpack.c.b16 %v831, %v830
          %864 = vmatprep.subr.bf16.mxu0 0
          %865 = vmatpush1.bf16.msra.mxu0 %v832
          %866 = vmatprep.subr.bf16.mxu0 0
          %867 = vmatpush1.bf16.msra.mxu0 %v833
          %868 = vmatprep.subr.bf16.mxu0 0
          %869 = vmatpush1.bf16.msra.mxu0 %v834
          %870 = vmatprep.subr.bf16.mxu0 0
          %871 = vmatpush1.bf16.msra.mxu0 %v835
          %872 = vmatprep.subr.bf16.mxu0 0
          %873 = vmatpush1.bf16.msra.mxu0 %v836
          %874 = vmatprep.subr.bf16.mxu0 0
          %875 = vmatpush1.bf16.msra.mxu0 %v837
          %876 = vmatprep.subr.bf16.mxu0 0
          %877 = vmatpush1.bf16.msra.mxu0 %v838
          %878 = vmatprep.subr.bf16.mxu0 0
          %879 = vmatpush1.bf16.msra.mxu0 %v839
          %880 = vmatprep.subr.bf16.mxu0 0
          %881 = vmatpush1.bf16.msra.mxu0 %v840
          %882 = vmatprep.subr.bf16.mxu0 0
          %883 = vmatpush1.bf16.msra.mxu0 %v841
          %884 = vmatprep.subr.bf16.mxu0 0
          %885 = vmatpush1.bf16.msra.mxu0 %v842
          %886 = vmatprep.subr.bf16.mxu0 0
          %887 = vmatpush1.bf16.msra.mxu0 %v843
          %888 = vmatprep.subr.bf16.mxu0 0
          %889 = vmatpush1.bf16.msra.mxu0 %v844
          %890 = vmatprep.subr.bf16.mxu0 0
          %891 = vmatpush1.bf16.msra.mxu0 %v845
          %892 = vmatprep.subr.bf16.mxu0 0
          %893 = vmatpush1.bf16.msra.mxu0 %v846
          %894 = vmatprep.subr.bf16.mxu0 0
          %895 = vmatpush1.bf16.msra.mxu0 %v847
          %896 = vmatprep.mubr.bf16.mxu0 %v737
          %897 = vmatmul.mubr.bf16.gmra.mrb[0].mxu0 %v736
          %v898 = vpop.f32.mrb[0].mxu0
          %v899 = vadd.f32 %v686, %v898
          %v900 = vpop.f32.mrb[0].mxu0
          %v901 = vpop.f32.mrb[0].mxu0
          %v902 = vadd.f32 %v686, %v901
          %v903 = vpop.f32.mrb[0].mxu0
          %904 = vmatprep.mubr.bf16.mxu0 %v739
          %905 = vmatmul.mubr.bf16.gmra.mrb[0].mxu0 %v738
          %v906 = vpop.f32.mrb[0].mxu0
          %v907 = vadd.f32 %v686, %v906
          %v908 = vpop.f32.mrb[0].mxu0
          %v909 = vpop.f32.mrb[0].mxu0
          %v910 = vadd.f32 %v686, %v909
          %v911 = vpop.f32.mrb[0].mxu0
          %912 = vmatprep.mubr.bf16.mxu0 %v741
          %913 = vmatmul.mubr.bf16.gmra.mrb[0].mxu0 %v740
          %v914 = vpop.f32.mrb[0].mxu0
          %v915 = vadd.f32 %v686, %v914
          %v916 = vpop.f32.mrb[0].mxu0
          %v917 = vpop.f32.mrb[0].mxu0
          %v918 = vadd.f32 %v686, %v917
          %v919 = vpop.f32.mrb[0].mxu0
          %920 = vmatprep.mubr.bf16.mxu0 %v743
          %921 = vmatmul.mubr.bf16.gmra.mrb[0].mxu0 %v742
          %v922 = vpop.f32.mrb[0].mxu0
          %v923 = vadd.f32 %v686, %v922
          %v924 = vpop.f32.mrb[0].mxu0
          %v925 = vpop.f32.mrb[0].mxu0
          %v926 = vadd.f32 %v686, %v925
          %v927 = vpop.f32.mrb[0].mxu0
          %928 = vmatprep.mubr.bf16.mxu0 %v745
          %929 = vmatmul.mubr.bf16.gmra.mrb[0].mxu0 %v744
          %v930 = vpop.f32.mrb[0].mxu0
          %v931 = vadd.f32 %v686, %v930
          %v932 = vpop.f32.mrb[0].mxu0
          %v933 = vpop.f32.mrb[0].mxu0
          %v934 = vadd.f32 %v686, %v933
          %v935 = vpop.f32.mrb[0].mxu0
          %936 = vmatprep.mubr.bf16.mxu0 %v747
          %937 = vmatmul.mubr.bf16.gmra.mrb[0].mxu0 %v746
          %v938 = vpop.f32.mrb[0].mxu0
          %v939 = vadd.f32 %v686, %v938
          %v940 = vpop.f32.mrb[0].mxu0
          %v941 = vpop.f32.mrb[0].mxu0
          %v942 = vadd.f32 %v686, %v941
          %v943 = vpop.f32.mrb[0].mxu0
          %944 = vmatprep.mubr.bf16.mxu0 %v749
          %945 = vmatmul.mubr.bf16.gmra.mrb[0].mxu0 %v748
          %v946 = vpop.f32.mrb[0].mxu0
          %v947 = vadd.f32 %v686, %v946
          %v948 = vpop.f32.mrb[0].mxu0
          %v949 = vpop.f32.mrb[0].mxu0
          %v950 = vadd.f32 %v686, %v949
          %v951 = vpop.f32.mrb[0].mxu0
          %952 = vmatprep.mubr.bf16.mxu0 %v751
          %953 = vmatmul.mubr.bf16.gmra.mrb[0].mxu0 %v750
          %v954 = vpop.f32.mrb[0].mxu0
          %v955 = vadd.f32 %v686, %v954
          %v956 = vpop.f32.mrb[0].mxu0
          %v957 = vpop.f32.mrb[0].mxu0
          %v958 = vadd.f32 %v686, %v957
          %v959 = vpop.f32.mrb[0].mxu0
          %960 = vdwg.mxu0
          %v961 = vtanh.pop %v899
          %v962 = vtanh.pop %v902
          %v963 = vtanh.pop %v907
          %v964 = vtanh.pop %v910
          %v965 = vtanh.pop %v915
          %v966 = vtanh.pop %v918
          %v967 = vtanh.pop %v923
          %v968 = vtanh.pop %v926
          %v969 = vtanh.pop %v931
          %v970 = vtanh.pop %v934
          %v971 = vtanh.pop %v939
          %v972 = vtanh.pop %v942
          %v973 = vtanh.pop %v947
          %v974 = vtanh.pop %v950
          %v975 = vtanh.pop %v955
          %v976 = vtanh.pop %v958
          %v977 = vpack.c.bf16 %v962, %v961
          %v978 = vpack.c.bf16 %v964, %v963
          %v979 = vpack.c.bf16 %v966, %v965
          %v980 = vpack.c.bf16 %v968, %v967
          %v981 = vpack.c.bf16 %v970, %v969
          %v982 = vpack.c.bf16 %v972, %v971
          %v983 = vpack.c.bf16 %v974, %v973
          %v984 = vpack.c.bf16 %v976, %v975
          %v985 = vld [vmem:[#allocation12] sm:$0xff]
          %v986 = vld [vmem:[#allocation12 + $0x8] sm:$0xff]
          %v987 = vld [vmem:[#allocation12 + $0x10] sm:$0xff]
          %v988 = vld [vmem:[#allocation12 + $0x18] sm:$0xff]
          %v989 = vld [vmem:[#allocation12 + $0x20] sm:$0xff]
          %v990 = vld [vmem:[#allocation12 + $0x28] sm:$0xff]
          %v991 = vld [vmem:[#allocation12 + $0x30] sm:$0xff]
          %v992 = vld [vmem:[#allocation12 + $0x38] sm:$0xff]
          %v993 = vld [vmem:[#allocation12 + $0x40] sm:$0xff]
          %v994 = vld [vmem:[#allocation12 + $0x48] sm:$0xff]
          %v995 = vld [vmem:[#allocation12 + $0x50] sm:$0xff]
          %v996 = vld [vmem:[#allocation12 + $0x58] sm:$0xff]
          %v997 = vld [vmem:[#allocation12 + $0x60] sm:$0xff]
          %v998 = vld [vmem:[#allocation12 + $0x68] sm:$0xff]
          %v999 = vld [vmem:[#allocation12 + $0x70] sm:$0xff]
          %v1000 = vld [vmem:[#allocation12 + $0x78] sm:$0xff]
          %v1001 = vld [vmem:[#allocation13] sm:$0x3]
          %v1003 = vlaneseq
          %v1004 = vshrl.u32 %v1003, 7
          %v1005 = vsub.s32 0, %v1004
          %v1006 = vrot.slane %v1001, %v1005
          %v1007 = vlaneseq
          %v1008 = vshrl.u32 %v1007, 7
          %v1009 = vsub.s32 1, %v1008
          %v1010 = vrot.slane %v1001, %v1009
          %v1029 = vunpack.c.l.b16 %v985
          %v1030 = vunpack.c.h.b16 %v985
          %v1031 = vunpack.c.l.b16 %v986
          %v1032 = vunpack.c.h.b16 %v986
          %v1033 = vunpack.c.l.b16 %v987
          %v1034 = vunpack.c.h.b16 %v987
          %v1035 = vunpack.c.l.b16 %v988
          %v1036 = vunpack.c.h.b16 %v988
          %v1037 = vunpack.c.l.b16 %v989
          %v1038 = vunpack.c.h.b16 %v989
          %v1039 = vunpack.c.l.b16 %v990
          %v1040 = vunpack.c.h.b16 %v990
          %v1041 = vunpack.c.l.b16 %v991
          %v1042 = vunpack.c.h.b16 %v991
          %v1043 = vunpack.c.l.b16 %v992
          %v1044 = vunpack.c.h.b16 %v992
          %v1045 = vunpack.c.l.b16 %v993
          %v1046 = vunpack.c.h.b16 %v993
          %v1047 = vunpack.c.l.b16 %v994
          %v1048 = vunpack.c.h.b16 %v994
          %v1049 = vunpack.c.l.b16 %v995
          %v1050 = vunpack.c.h.b16 %v995
          %v1051 = vunpack.c.l.b16 %v996
          %v1052 = vunpack.c.h.b16 %v996
          %v1053 = vunpack.c.l.b16 %v997
          %v1054 = vunpack.c.h.b16 %v997
          %v1055 = vunpack.c.l.b16 %v998
          %v1056 = vunpack.c.h.b16 %v998
          %v1057 = vunpack.c.l.b16 %v999
          %v1058 = vunpack.c.h.b16 %v999
          %v1059 = vunpack.c.l.b16 %v1000
          %v1060 = vunpack.c.h.b16 %v1000
          %v1061 = vpack.c.b16 %v1031, %v1029
          %v1062 = vpack.c.b16 %v1032, %v1030
          %v1063 = vpack.c.b16 %v1035, %v1033
          %v1064 = vpack.c.b16 %v1036, %v1034
          %v1065 = vpack.c.b16 %v1039, %v1037
          %v1066 = vpack.c.b16 %v1040, %v1038
          %v1067 = vpack.c.b16 %v1043, %v1041
          %v1068 = vpack.c.b16 %v1044, %v1042
          %v1069 = vpack.c.b16 %v1047, %v1045
          %v1070 = vpack.c.b16 %v1048, %v1046
          %v1071 = vpack.c.b16 %v1051, %v1049
          %v1072 = vpack.c.b16 %v1052, %v1050
          %v1073 = vpack.c.b16 %v1055, %v1053
          %v1074 = vpack.c.b16 %v1056, %v1054
          %v1075 = vpack.c.b16 %v1059, %v1057
          %v1076 = vpack.c.b16 %v1060, %v1058
          %1093 = vmatprep.subr.bf16.mxu0 %v1062
          %1094 = vmatpush1.bf16.msra.mxu0 %v1061
          %1095 = vmatprep.subr.bf16.mxu0 %v1064
          %1096 = vmatpush1.bf16.msra.mxu0 %v1063
          %1097 = vmatprep.subr.bf16.mxu0 %v1066
          %1098 = vmatpush1.bf16.msra.mxu0 %v1065
          %1099 = vmatprep.subr.bf16.mxu0 %v1068
          %1100 = vmatpush1.bf16.msra.mxu0 %v1067
          %1101 = vmatprep.subr.bf16.mxu0 %v1070
          %1102 = vmatpush1.bf16.msra.mxu0 %v1069
          %1103 = vmatprep.subr.bf16.mxu0 %v1072
          %1104 = vmatpush1.bf16.msra.mxu0 %v1071
          %1105 = vmatprep.subr.bf16.mxu0 %v1074
          %1106 = vmatpush1.bf16.msra.mxu0 %v1073
          %1107 = vmatprep.subr.bf16.mxu0 %v1076
          %1108 = vmatpush1.bf16.msra.mxu0 %v1075
          %1109 = vmatprep.subr.bf16.mxu0 0
          %1110 = vmatpush1.bf16.msra.mxu0 0
          %1111 = vmatprep.subr.bf16.mxu0 0
          %1112 = vmatpush1.bf16.msra.mxu0 0
          %1113 = vmatprep.subr.bf16.mxu0 0
          %1114 = vmatpush1.bf16.msra.mxu0 0
          %1115 = vmatprep.subr.bf16.mxu0 0
          %1116 = vmatpush1.bf16.msra.mxu0 0
          %1117 = vmatprep.subr.bf16.mxu0 0
          %1118 = vmatpush1.bf16.msra.mxu0 0
          %1119 = vmatprep.subr.bf16.mxu0 0
          %1120 = vmatpush1.bf16.msra.mxu0 0
          %1121 = vmatprep.subr.bf16.mxu0 0
          %1122 = vmatpush1.bf16.msra.mxu0 0
          %1123 = vmatprep.subr.bf16.mxu0 0
          %1124 = vmatpush1.bf16.msra.mxu0 0
          %1125 = vmatprep.mubr.bf16.mxu0 0
          %1126 = vmatmul.mubr.bf16.gmra.mrb[0].mxu0 %v977
          %v1127 = vpop.f32.mrb[0].mxu0
          %v1128 = vadd.f32 %v1006, %v1127
          %v1129 = vpop.f32.mrb[0].mxu0
          %v1130 = vadd.f32 %v1010, %v1129
          %v1131 = vpop.f32.mrb[0].mxu0
          %v1132 = vadd.f32 %v1006, %v1131
          %v1133 = vpop.f32.mrb[0].mxu0
          %v1134 = vadd.f32 %v1010, %v1133
          %1135 = vmatprep.mubr.bf16.mxu0 0
          %1136 = vmatmul.mubr.bf16.gmra.mrb[0].mxu0 %v978
          %v1137 = vpop.f32.mrb[0].mxu0
          %v1138 = vadd.f32 %v1006, %v1137
          %v1139 = vpop.f32.mrb[0].mxu0
          %v1140 = vadd.f32 %v1010, %v1139
          %v1141 = vpop.f32.mrb[0].mxu0
          %v1142 = vadd.f32 %v1006, %v1141
          %v1143 = vpop.f32.mrb[0].mxu0
          %v1144 = vadd.f32 %v1010, %v1143
          %1145 = vmatprep.mubr.bf16.mxu0 0
          %1146 = vmatmul.mubr.bf16.gmra.mrb[0].mxu0 %v979
          %v1147 = vpop.f32.mrb[0].mxu0
          %v1148 = vadd.f32 %v1006, %v1147
          %v1149 = vpop.f32.mrb[0].mxu0
          %v1150 = vadd.f32 %v1010, %v1149
          %v1151 = vpop.f32.mrb[0].mxu0
          %v1152 = vadd.f32 %v1006, %v1151
          %v1153 = vpop.f32.mrb[0].mxu0
          %v1154 = vadd.f32 %v1010, %v1153
          %1155 = vmatprep.mubr.bf16.mxu0 0
          %1156 = vmatmul.mubr.bf16.gmra.mrb[0].mxu0 %v980
          %v1157 = vpop.f32.mrb[0].mxu0
          %v1158 = vadd.f32 %v1006, %v1157
          %v1159 = vpop.f32.mrb[0].mxu0
          %v1160 = vadd.f32 %v1010, %v1159
          %v1161 = vpop.f32.mrb[0].mxu0
          %v1162 = vadd.f32 %v1006, %v1161
          %v1163 = vpop.f32.mrb[0].mxu0
          %v1164 = vadd.f32 %v1010, %v1163
          %1165 = vmatprep.mubr.bf16.mxu0 0
          %1166 = vmatmul.mubr.bf16.gmra.mrb[0].mxu0 %v981
          %v1167 = vpop.f32.mrb[0].mxu0
          %v1168 = vadd.f32 %v1006, %v1167
          %v1169 = vpop.f32.mrb[0].mxu0
          %v1170 = vadd.f32 %v1010, %v1169
          %v1171 = vpop.f32.mrb[0].mxu0
          %v1172 = vadd.f32 %v1006, %v1171
          %v1173 = vpop.f32.mrb[0].mxu0
          %v1174 = vadd.f32 %v1010, %v1173
          %1175 = vmatprep.mubr.bf16.mxu0 0
          %1176 = vmatmul.mubr.bf16.gmra.mrb[0].mxu0 %v982
          %v1177 = vpop.f32.mrb[0].mxu0
          %v1178 = vadd.f32 %v1006, %v1177
          %v1179 = vpop.f32.mrb[0].mxu0
          %v1180 = vadd.f32 %v1010, %v1179
          %v1181 = vpop.f32.mrb[0].mxu0
          %v1182 = vadd.f32 %v1006, %v1181
          %v1183 = vpop.f32.mrb[0].mxu0
          %v1184 = vadd.f32 %v1010, %v1183
          %1185 = vmatprep.mubr.bf16.mxu0 0
          %1186 = vmatmul.mubr.bf16.gmra.mrb[0].mxu0 %v983
          %v1187 = vpop.f32.mrb[0].mxu0
          %v1188 = vadd.f32 %v1006, %v1187
          %v1189 = vpop.f32.mrb[0].mxu0
          %v1190 = vadd.f32 %v1010, %v1189
          %v1191 = vpop.f32.mrb[0].mxu0
          %v1192 = vadd.f32 %v1006, %v1191
          %v1193 = vpop.f32.mrb[0].mxu0
          %v1194 = vadd.f32 %v1010, %v1193
          %1195 = vmatprep.mubr.bf16.mxu0 0
          %1196 = vmatmul.mubr.bf16.gmra.mrb[0].mxu0 %v984
          %v1197 = vpop.f32.mrb[0].mxu0
          %v1198 = vadd.f32 %v1006, %v1197
          %v1199 = vpop.f32.mrb[0].mxu0
          %v1200 = vadd.f32 %v1010, %v1199
          %v1201 = vpop.f32.mrb[0].mxu0
          %v1202 = vadd.f32 %v1006, %v1201
          %v1203 = vpop.f32.mrb[0].mxu0
          %v1204 = vadd.f32 %v1010, %v1203
          %1205 = vdwg.mxu0
          %v1206 = vmax.f32 %v1130, 0.0
          %v1207 = vmax.f32 %v1134, 0.0
          %v1208 = vmax.f32 %v1140, 0.0
          %v1209 = vmax.f32 %v1144, 0.0
          %v1210 = vmax.f32 %v1150, 0.0
          %v1211 = vmax.f32 %v1154, 0.0
          %v1212 = vmax.f32 %v1160, 0.0
          %v1213 = vmax.f32 %v1164, 0.0
          %v1214 = vmax.f32 %v1170, 0.0
          %v1215 = vmax.f32 %v1174, 0.0
          %v1216 = vmax.f32 %v1180, 0.0
          %v1217 = vmax.f32 %v1184, 0.0
          %v1218 = vmax.f32 %v1190, 0.0
          %v1219 = vmax.f32 %v1194, 0.0
          %v1220 = vmax.f32 %v1200, 0.0
          %v1221 = vmax.f32 %v1204, 0.0
          %v1222 = vand.u32 2147483647, %v1130
          %v1223 = vand.u32 2147483647, %v1134
          %v1224 = vand.u32 2147483647, %v1140
          %v1225 = vand.u32 2147483647, %v1144
          %v1226 = vand.u32 2147483647, %v1150
          %v1227 = vand.u32 2147483647, %v1154
          %v1228 = vand.u32 2147483647, %v1160
          %v1229 = vand.u32 2147483647, %v1164
          %v1230 = vand.u32 2147483647, %v1170
          %v1231 = vand.u32 2147483647, %v1174
          %v1232 = vand.u32 2147483647, %v1180
          %v1233 = vand.u32 2147483647, %v1184
          %v1234 = vand.u32 2147483647, %v1190
          %v1235 = vand.u32 2147483647, %v1194
          %v1236 = vand.u32 2147483647, %v1200
          %v1237 = vand.u32 2147483647, %v1204
          %v1238 = vsub.f32 0.0, %v1222
          %v1239 = vsub.f32 0.0, %v1223
          %v1240 = vsub.f32 0.0, %v1224
          %v1241 = vsub.f32 0.0, %v1225
          %v1242 = vsub.f32 0.0, %v1226
          %v1243 = vsub.f32 0.0, %v1227
          %v1244 = vsub.f32 0.0, %v1228
          %v1245 = vsub.f32 0.0, %v1229
          %v1246 = vsub.f32 0.0, %v1230
          %v1247 = vsub.f32 0.0, %v1231
          %v1248 = vsub.f32 0.0, %v1232
          %v1249 = vsub.f32 0.0, %v1233
          %v1250 = vsub.f32 0.0, %v1234
          %v1251 = vsub.f32 0.0, %v1235
          %v1252 = vsub.f32 0.0, %v1236
          %v1253 = vsub.f32 0.0, %v1237
          %v1254 = vmul.f32 %v1238, 1.442695
          %v1255 = vpow.pop %v1254
          %v1256 = vmul.f32 %v1239, 1.442695
          %v1257 = vpow.pop %v1256
          %v1258 = vmul.f32 %v1240, 1.442695
          %v1259 = vpow.pop %v1258
          %v1260 = vmul.f32 %v1241, 1.442695
          %v1261 = vpow.pop %v1260
          %v1262 = vmul.f32 %v1242, 1.442695
          %v1263 = vpow.pop %v1262
          %v1264 = vmul.f32 %v1243, 1.442695
          %v1265 = vpow.pop %v1264
          %v1266 = vmul.f32 %v1244, 1.442695
          %v1267 = vpow.pop %v1266
          %v1268 = vmul.f32 %v1245, 1.442695
          %v1269 = vpow.pop %v1268
          %v1270 = vmul.f32 %v1246, 1.442695
          %v1271 = vpow.pop %v1270
          %v1272 = vmul.f32 %v1247, 1.442695
          %v1273 = vpow.pop %v1272
          %v1274 = vmul.f32 %v1248, 1.442695
          %v1275 = vpow.pop %v1274
          %v1276 = vmul.f32 %v1249, 1.442695
          %v1277 = vpow.pop %v1276
          %v1278 = vmul.f32 %v1250, 1.442695
          %v1279 = vpow.pop %v1278
          %v1280 = vmul.f32 %v1251, 1.442695
          %v1281 = vpow.pop %v1280
          %v1282 = vmul.f32 %v1252, 1.442695
          %v1283 = vpow.pop %v1282
          %v1284 = vmul.f32 %v1253, 1.442695
          %v1285 = vpow.pop %v1284
          %v1286 = vadd.f32 %v1255, 1.0
          %v1287 = vlog2.pop %v1286
          %v1288 = vmul.f32 %v1287, 0.6931472
          %v1289 = vmul.f32 -0.5, %v1255
          %v1290 = vadd.f32 %v1289, 1.0
          %v1291 = vmul.f32 %v1290, %v1255
          %v1292 = vand.u32 2147483647, %v1255
          %vm1293 = vcmp.lt.f32.partialorder %v1292, 0.0004427343
          %v1294 = vsel %vm1293, %v1291, %v1288
          %v1295 = vadd.f32 %v1257, 1.0
          %v1296 = vlog2.pop %v1295
          %v1297 = vmul.f32 %v1296, 0.6931472
          %v1298 = vmul.f32 -0.5, %v1257
          %v1299 = vadd.f32 %v1298, 1.0
          %v1300 = vmul.f32 %v1299, %v1257
          %v1301 = vand.u32 2147483647, %v1257
          %vm1302 = vcmp.lt.f32.partialorder %v1301, 0.0004427343
          %v1303 = vsel %vm1302, %v1300, %v1297
          %v1304 = vadd.f32 %v1259, 1.0
          %v1305 = vlog2.pop %v1304
          %v1306 = vmul.f32 %v1305, 0.6931472
          %v1307 = vmul.f32 -0.5, %v1259
          %v1308 = vadd.f32 %v1307, 1.0
          %v1309 = vmul.f32 %v1308, %v1259
          %v1310 = vand.u32 2147483647, %v1259
          %vm1311 = vcmp.lt.f32.partialorder %v1310, 0.0004427343
          %v1312 = vsel %vm1311, %v1309, %v1306
          %v1313 = vadd.f32 %v1261, 1.0
          %v1314 = vlog2.pop %v1313
          %v1315 = vmul.f32 %v1314, 0.6931472
          %v1316 = vmul.f32 -0.5, %v1261
          %v1317 = vadd.f32 %v1316, 1.0
          %v1318 = vmul.f32 %v1317, %v1261
          %v1319 = vand.u32 2147483647, %v1261
          %vm1320 = vcmp.lt.f32.partialorder %v1319, 0.0004427343
          %v1321 = vsel %vm1320, %v1318, %v1315
          %v1322 = vadd.f32 %v1263, 1.0
          %v1323 = vlog2.pop %v1322
          %v1324 = vmul.f32 %v1323, 0.6931472
          %v1325 = vmul.f32 -0.5, %v1263
          %v1326 = vadd.f32 %v1325, 1.0
          %v1327 = vmul.f32 %v1326, %v1263
          %v1328 = vand.u32 2147483647, %v1263
          %vm1329 = vcmp.lt.f32.partialorder %v1328, 0.0004427343
          %v1330 = vsel %vm1329, %v1327, %v1324
          %v1331 = vadd.f32 %v1265, 1.0
          %v1332 = vlog2.pop %v1331
          %v1333 = vmul.f32 %v1332, 0.6931472
          %v1334 = vmul.f32 -0.5, %v1265
          %v1335 = vadd.f32 %v1334, 1.0
          %v1336 = vmul.f32 %v1335, %v1265
          %v1337 = vand.u32 2147483647, %v1265
          %vm1338 = vcmp.lt.f32.partialorder %v1337, 0.0004427343
          %v1339 = vsel %vm1338, %v1336, %v1333
          %v1340 = vadd.f32 %v1267, 1.0
          %v1341 = vlog2.pop %v1340
          %v1342 = vmul.f32 %v1341, 0.6931472
          %v1343 = vmul.f32 -0.5, %v1267
          %v1344 = vadd.f32 %v1343, 1.0
          %v1345 = vmul.f32 %v1344, %v1267
          %v1346 = vand.u32 2147483647, %v1267
          %vm1347 = vcmp.lt.f32.partialorder %v1346, 0.0004427343
          %v1348 = vsel %vm1347, %v1345, %v1342
          %v1349 = vadd.f32 %v1269, 1.0
          %v1350 = vlog2.pop %v1349
          %v1351 = vmul.f32 %v1350, 0.6931472
          %v1352 = vmul.f32 -0.5, %v1269
          %v1353 = vadd.f32 %v1352, 1.0
          %v1354 = vmul.f32 %v1353, %v1269
          %v1355 = vand.u32 2147483647, %v1269
          %vm1356 = vcmp.lt.f32.partialorder %v1355, 0.0004427343
          %v1357 = vsel %vm1356, %v1354, %v1351
          %v1358 = vadd.f32 %v1271, 1.0
          %v1359 = vlog2.pop %v1358
          %v1360 = vmul.f32 %v1359, 0.6931472
          %v1361 = vmul.f32 -0.5, %v1271
          %v1362 = vadd.f32 %v1361, 1.0
          %v1363 = vmul.f32 %v1362, %v1271
          %v1364 = vand.u32 2147483647, %v1271
          %vm1365 = vcmp.lt.f32.partialorder %v1364, 0.0004427343
          %v1366 = vsel %vm1365, %v1363, %v1360
          %v1367 = vadd.f32 %v1273, 1.0
          %v1368 = vlog2.pop %v1367
          %v1369 = vmul.f32 %v1368, 0.6931472
          %v1370 = vmul.f32 -0.5, %v1273
          %v1371 = vadd.f32 %v1370, 1.0
          %v1372 = vmul.f32 %v1371, %v1273
          %v1373 = vand.u32 2147483647, %v1273
          %vm1374 = vcmp.lt.f32.partialorder %v1373, 0.0004427343
          %v1375 = vsel %vm1374, %v1372, %v1369
          %v1376 = vadd.f32 %v1275, 1.0
          %v1377 = vlog2.pop %v1376
          %v1378 = vmul.f32 %v1377, 0.6931472
          %v1379 = vmul.f32 -0.5, %v1275
          %v1380 = vadd.f32 %v1379, 1.0
          %v1381 = vmul.f32 %v1380, %v1275
          %v1382 = vand.u32 2147483647, %v1275
          %vm1383 = vcmp.lt.f32.partialorder %v1382, 0.0004427343
          %v1384 = vsel %vm1383, %v1381, %v1378
          %v1385 = vadd.f32 %v1277, 1.0
          %v1386 = vlog2.pop %v1385
          %v1387 = vmul.f32 %v1386, 0.6931472
          %v1388 = vmul.f32 -0.5, %v1277
          %v1389 = vadd.f32 %v1388, 1.0
          %v1390 = vmul.f32 %v1389, %v1277
          %v1391 = vand.u32 2147483647, %v1277
          %vm1392 = vcmp.lt.f32.partialorder %v1391, 0.0004427343
          %v1393 = vsel %vm1392, %v1390, %v1387
          %v1394 = vadd.f32 %v1279, 1.0
          %v1395 = vlog2.pop %v1394
          %v1396 = vmul.f32 %v1395, 0.6931472
          %v1397 = vmul.f32 -0.5, %v1279
          %v1398 = vadd.f32 %v1397, 1.0
          %v1399 = vmul.f32 %v1398, %v1279
          %v1400 = vand.u32 2147483647, %v1279
          %vm1401 = vcmp.lt.f32.partialorder %v1400, 0.0004427343
          %v1402 = vsel %vm1401, %v1399, %v1396
          %v1403 = vadd.f32 %v1281, 1.0
          %v1404 = vlog2.pop %v1403
          %v1405 = vmul.f32 %v1404, 0.6931472
          %v1406 = vmul.f32 -0.5, %v1281
          %v1407 = vadd.f32 %v1406, 1.0
          %v1408 = vmul.f32 %v1407, %v1281
          %v1409 = vand.u32 2147483647, %v1281
          %vm1410 = vcmp.lt.f32.partialorder %v1409, 0.0004427343
          %v1411 = vsel %vm1410, %v1408, %v1405
          %v1412 = vadd.f32 %v1283, 1.0
          %v1413 = vlog2.pop %v1412
          %v1414 = vmul.f32 %v1413, 0.6931472
          %v1415 = vmul.f32 -0.5, %v1283
          %v1416 = vadd.f32 %v1415, 1.0
          %v1417 = vmul.f32 %v1416, %v1283
          %v1418 = vand.u32 2147483647, %v1283
          %vm1419 = vcmp.lt.f32.partialorder %v1418, 0.0004427343
          %v1420 = vsel %vm1419, %v1417, %v1414
          %v1421 = vadd.f32 %v1285, 1.0
          %v1422 = vlog2.pop %v1421
          %v1423 = vmul.f32 %v1422, 0.6931472
          %v1424 = vmul.f32 -0.5, %v1285
          %v1425 = vadd.f32 %v1424, 1.0
          %v1426 = vmul.f32 %v1425, %v1285
          %v1427 = vand.u32 2147483647, %v1285
          %vm1428 = vcmp.lt.f32.partialorder %v1427, 0.0004427343
          %v1429 = vsel %vm1428, %v1426, %v1423
          %v1430 = vadd.f32 %v1206, %v1294
          %v1431 = vadd.f32 %v1207, %v1303
          %v1432 = vadd.f32 %v1208, %v1312
          %v1433 = vadd.f32 %v1209, %v1321
          %v1434 = vadd.f32 %v1210, %v1330
          %v1435 = vadd.f32 %v1211, %v1339
          %v1436 = vadd.f32 %v1212, %v1348
          %v1437 = vadd.f32 %v1213, %v1357
          %v1438 = vadd.f32 %v1214, %v1366
          %v1439 = vadd.f32 %v1215, %v1375
          %v1440 = vadd.f32 %v1216, %v1384
          %v1441 = vadd.f32 %v1217, %v1393
          %v1442 = vadd.f32 %v1218, %v1402
          %v1443 = vadd.f32 %v1219, %v1411
          %v1444 = vadd.f32 %v1220, %v1420
          %v1445 = vadd.f32 %v1221, %v1429
          %1446 = vst [vmem:[#allocation2] sm:$0xff] %v1128
          %1447 = vst [vmem:[#allocation2 + $0x8] sm:$0xff] %v1132
          %1448 = vst [vmem:[#allocation2 + $0x10] sm:$0xff] %v1138
          %1449 = vst [vmem:[#allocation2 + $0x18] sm:$0xff] %v1142
          %1450 = vst [vmem:[#allocation2 + $0x20] sm:$0xff] %v1148
          %1451 = vst [vmem:[#allocation2 + $0x28] sm:$0xff] %v1152
          %1452 = vst [vmem:[#allocation2 + $0x30] sm:$0xff] %v1158
          %1453 = vst [vmem:[#allocation2 + $0x38] sm:$0xff] %v1162
          %1454 = vst [vmem:[#allocation2 + $0x40] sm:$0xff] %v1168
          %1455 = vst [vmem:[#allocation2 + $0x48] sm:$0xff] %v1172
          %1456 = vst [vmem:[#allocation2 + $0x50] sm:$0xff] %v1178
          %1457 = vst [vmem:[#allocation2 + $0x58] sm:$0xff] %v1182
          %1458 = vst [vmem:[#allocation2 + $0x60] sm:$0xff] %v1188
          %1459 = vst [vmem:[#allocation2 + $0x68] sm:$0xff] %v1192
          %1460 = vst [vmem:[#allocation2 + $0x70] sm:$0xff] %v1198
          %1461 = vst [vmem:[#allocation2 + $0x78] sm:$0xff] %v1202
          %1462 = vst [vmem:[#allocation3] sm:$0xff] %v1430
          %1463 = vst [vmem:[#allocation3 + $0x8] sm:$0xff] %v1431
          %1464 = vst [vmem:[#allocation3 + $0x10] sm:$0xff] %v1432
          %1465 = vst [vmem:[#allocation3 + $0x18] sm:$0xff] %v1433
          %1466 = vst [vmem:[#allocation3 + $0x20] sm:$0xff] %v1434
          %1467 = vst [vmem:[#allocation3 + $0x28] sm:$0xff] %v1435
          %1468 = vst [vmem:[#allocation3 + $0x30] sm:$0xff] %v1436
          %1469 = vst [vmem:[#allocation3 + $0x38] sm:$0xff] %v1437
          %1470 = vst [vmem:[#allocation3 + $0x40] sm:$0xff] %v1438
          %1471 = vst [vmem:[#allocation3 + $0x48] sm:$0xff] %v1439
          %1472 = vst [vmem:[#allocation3 + $0x50] sm:$0xff] %v1440
          %1473 = vst [vmem:[#allocation3 + $0x58] sm:$0xff] %v1441
          %1474 = vst [vmem:[#allocation3 + $0x60] sm:$0xff] %v1442
          %1475 = vst [vmem:[#allocation3 + $0x68] sm:$0xff] %v1443
          %1476 = vst [vmem:[#allocation3 + $0x70] sm:$0xff] %v1444
          %1477 = vst [vmem:[#allocation3 + $0x78] sm:$0xff] %v1445
          %1478 = vst [vmem:[#allocation21] sm:$0xff] %v1128
          %1479 = vst [vmem:[#allocation21 + $0x8] sm:$0xff] %v1132
          %1480 = vst [vmem:[#allocation21 + $0x10] sm:$0xff] %v1138
          %1481 = vst [vmem:[#allocation21 + $0x18] sm:$0xff] %v1142
          %1482 = vst [vmem:[#allocation21 + $0x20] sm:$0xff] %v1148
          %1483 = vst [vmem:[#allocation21 + $0x28] sm:$0xff] %v1152
          %1484 = vst [vmem:[#allocation21 + $0x30] sm:$0xff] %v1158
          %1485 = vst [vmem:[#allocation21 + $0x38] sm:$0xff] %v1162
          %1486 = vst [vmem:[#allocation21 + $0x40] sm:$0xff] %v1168
          %1487 = vst [vmem:[#allocation21 + $0x48] sm:$0xff] %v1172
          %1488 = vst [vmem:[#allocation21 + $0x50] sm:$0xff] %v1178
          %1489 = vst [vmem:[#allocation21 + $0x58] sm:$0xff] %v1182
          %1490 = vst [vmem:[#allocation21 + $0x60] sm:$0xff] %v1188
          %1491 = vst [vmem:[#allocation21 + $0x68] sm:$0xff] %v1192
          %1492 = vst [vmem:[#allocation21 + $0x70] sm:$0xff] %v1198
          %1493 = vst [vmem:[#allocation21 + $0x78] sm:$0xff] %v1202
          %1494 = vst [vmem:[#allocation22] sm:$0xff] %v1430
          %1495 = vst [vmem:[#allocation22 + $0x8] sm:$0xff] %v1431
          %1496 = vst [vmem:[#allocation22 + $0x10] sm:$0xff] %v1432
          %1497 = vst [vmem:[#allocation22 + $0x18] sm:$0xff] %v1433
          %1498 = vst [vmem:[#allocation22 + $0x20] sm:$0xff] %v1434
          %1499 = vst [vmem:[#allocation22 + $0x28] sm:$0xff] %v1435
          %1500 = vst [vmem:[#allocation22 + $0x30] sm:$0xff] %v1436
          %1501 = vst [vmem:[#allocation22 + $0x38] sm:$0xff] %v1437
          %1502 = vst [vmem:[#allocation22 + $0x40] sm:$0xff] %v1438
          %1503 = vst [vmem:[#allocation22 + $0x48] sm:$0xff] %v1439
          %1504 = vst [vmem:[#allocation22 + $0x50] sm:$0xff] %v1440
          %1505 = vst [vmem:[#allocation22 + $0x58] sm:$0xff] %v1441
          %1506 = vst [vmem:[#allocation22 + $0x60] sm:$0xff] %v1442
          %1507 = vst [vmem:[#allocation22 + $0x68] sm:$0xff] %v1443
          %1508 = vst [vmem:[#allocation22 + $0x70] sm:$0xff] %v1444
          %1509 = vst [vmem:[#allocation22 + $0x78] sm:$0xff] %v1445
        $region104: #{iwae_forward.1} parent=59 // pred_fallthru
          _
        %v1510 = vld [vmem:[#allocation2] sm:$0xff]
        %v1511 = vld [vmem:[#allocation2 + $0x8] sm:$0xff]
        %v1512 = vld [vmem:[#allocation2 + $0x10] sm:$0xff]
        %v1513 = vld [vmem:[#allocation2 + $0x18] sm:$0xff]
        %v1514 = vld [vmem:[#allocation2 + $0x20] sm:$0xff]
        %v1515 = vld [vmem:[#allocation2 + $0x28] sm:$0xff]
        %v1516 = vld [vmem:[#allocation2 + $0x30] sm:$0xff]
        %v1517 = vld [vmem:[#allocation2 + $0x38] sm:$0xff]
        %v1518 = vld [vmem:[#allocation2 + $0x40] sm:$0xff]
        %v1519 = vld [vmem:[#allocation2 + $0x48] sm:$0xff]
        %v1520 = vld [vmem:[#allocation2 + $0x50] sm:$0xff]
        %v1521 = vld [vmem:[#allocation2 + $0x58] sm:$0xff]
        %v1522 = vld [vmem:[#allocation2 + $0x60] sm:$0xff]
        %v1523 = vld [vmem:[#allocation2 + $0x68] sm:$0xff]
        %v1524 = vld [vmem:[#allocation2 + $0x70] sm:$0xff]
        %v1525 = vld [vmem:[#allocation2 + $0x78] sm:$0xff]
        %v1526 = vld [vmem:[#allocation3] sm:$0xff]
        %v1527 = vld [vmem:[#allocation3 + $0x8] sm:$0xff]
        %v1528 = vld [vmem:[#allocation3 + $0x10] sm:$0xff]
        %v1529 = vld [vmem:[#allocation3 + $0x18] sm:$0xff]
        %v1530 = vld [vmem:[#allocation3 + $0x20] sm:$0xff]
        %v1531 = vld [vmem:[#allocation3 + $0x28] sm:$0xff]
        %v1532 = vld [vmem:[#allocation3 + $0x30] sm:$0xff]
        %v1533 = vld [vmem:[#allocation3 + $0x38] sm:$0xff]
        %v1534 = vld [vmem:[#allocation3 + $0x40] sm:$0xff]
        %v1535 = vld [vmem:[#allocation3 + $0x48] sm:$0xff]
        %v1536 = vld [vmem:[#allocation3 + $0x50] sm:$0xff]
        %v1537 = vld [vmem:[#allocation3 + $0x58] sm:$0xff]
        %v1538 = vld [vmem:[#allocation3 + $0x60] sm:$0xff]
        %v1539 = vld [vmem:[#allocation3 + $0x68] sm:$0xff]
        %v1540 = vld [vmem:[#allocation3 + $0x70] sm:$0xff]
        %v1541 = vld [vmem:[#allocation3 + $0x78] sm:$0xff]
        %v1542 = vld [vmem:[%s542] sm:$0xf]
        %v1543 = vld [vmem:[%s542 + $0x4] sm:$0xf]
        %v1544 = vld [vmem:[%s542 + $0x8] sm:$0xf]
        %v1545 = vld [vmem:[%s542 + $0xc] sm:$0xf]
        %v1546 = vld [vmem:[%s542 + $0x10] sm:$0xf]
        %v1547 = vld [vmem:[%s542 + $0x14] sm:$0xf]
        %v1548 = vld [vmem:[%s542 + $0x18] sm:$0xf]
        %v1549 = vld [vmem:[%s542 + $0x1c] sm:$0xf]
        %v1550 = vld [vmem:[%s542 + $0x20] sm:$0xf]
        %v1551 = vld [vmem:[%s542 + $0x24] sm:$0xf]
        %v1552 = vld [vmem:[%s542 + $0x28] sm:$0xf]
        %v1553 = vld [vmem:[%s542 + $0x2c] sm:$0xf]
        %v1554 = vld [vmem:[%s542 + $0x30] sm:$0xf]
        %v1555 = vld [vmem:[%s542 + $0x34] sm:$0xf]
        %v1556 = vld [vmem:[%s542 + $0x38] sm:$0xf]
        %v1557 = vld [vmem:[%s542 + $0x3c] sm:$0xf]
        %v1558 = vunpack.c.l.bf16 %v1542
        %v1559 = vunpack.c.l.bf16 %v1543
        %v1560 = vunpack.c.l.bf16 %v1544
        %v1561 = vunpack.c.l.bf16 %v1545
        %v1562 = vunpack.c.l.bf16 %v1546
        %v1563 = vunpack.c.l.bf16 %v1547
        %v1564 = vunpack.c.l.bf16 %v1548
        %v1565 = vunpack.c.l.bf16 %v1549
        %v1566 = vunpack.c.l.bf16 %v1550
        %v1567 = vunpack.c.l.bf16 %v1551
        %v1568 = vunpack.c.l.bf16 %v1552
        %v1569 = vunpack.c.l.bf16 %v1553
        %v1570 = vunpack.c.l.bf16 %v1554
        %v1571 = vunpack.c.l.bf16 %v1555
        %v1572 = vunpack.c.l.bf16 %v1556
        %v1573 = vunpack.c.l.bf16 %v1557
        %v1574 = vmul.f32 %v1526, %v1558
        %v1575 = vmul.f32 %v1527, %v1559
        %v1576 = vmul.f32 %v1528, %v1560
        %v1577 = vmul.f32 %v1529, %v1561
        %v1578 = vmul.f32 %v1530, %v1562
        %v1579 = vmul.f32 %v1531, %v1563
        %v1580 = vmul.f32 %v1532, %v1564
        %v1581 = vmul.f32 %v1533, %v1565
        %v1582 = vmul.f32 %v1534, %v1566
        %v1583 = vmul.f32 %v1535, %v1567
        %v1584 = vmul.f32 %v1536, %v1568
        %v1585 = vmul.f32 %v1537, %v1569
        %v1586 = vmul.f32 %v1538, %v1570
        %v1587 = vmul.f32 %v1539, %v1571
        %v1588 = vmul.f32 %v1540, %v1572
        %v1589 = vmul.f32 %v1541, %v1573
        %v1590 = vadd.f32 %v1510, %v1574
        %v1591 = vadd.f32 %v1511, %v1575
        %v1592 = vadd.f32 %v1512, %v1576
        %v1593 = vadd.f32 %v1513, %v1577
        %v1594 = vadd.f32 %v1514, %v1578
        %v1595 = vadd.f32 %v1515, %v1579
        %v1596 = vadd.f32 %v1516, %v1580
        %v1597 = vadd.f32 %v1517, %v1581
        %v1598 = vadd.f32 %v1518, %v1582
        %v1599 = vadd.f32 %v1519, %v1583
        %v1600 = vadd.f32 %v1520, %v1584
        %v1601 = vadd.f32 %v1521, %v1585
        %v1602 = vadd.f32 %v1522, %v1586
        %v1603 = vadd.f32 %v1523, %v1587
        %v1604 = vadd.f32 %v1524, %v1588
        %v1605 = vadd.f32 %v1525, %v1589
        %1606 = vst [vmem:[%s621] sm:$0xff] %v1590
        %1607 = vst [vmem:[%s621 + $0x8] sm:$0xff] %v1591
        %1608 = vst [vmem:[%s621 + $0x10] sm:$0xff] %v1592
        %1609 = vst [vmem:[%s621 + $0x18] sm:$0xff] %v1593
        %1610 = vst [vmem:[%s621 + $0x20] sm:$0xff] %v1594
        %1611 = vst [vmem:[%s621 + $0x28] sm:$0xff] %v1595
        %1612 = vst [vmem:[%s621 + $0x30] sm:$0xff] %v1596
        %1613 = vst [vmem:[%s621 + $0x38] sm:$0xff] %v1597
        %1614 = vst [vmem:[%s621 + $0x40] sm:$0xff] %v1598
        %1615 = vst [vmem:[%s621 + $0x48] sm:$0xff] %v1599
        %1616 = vst [vmem:[%s621 + $0x50] sm:$0xff] %v1600
        %1617 = vst [vmem:[%s621 + $0x58] sm:$0xff] %v1601
        %1618 = vst [vmem:[%s621 + $0x60] sm:$0xff] %v1602
        %1619 = vst [vmem:[%s621 + $0x68] sm:$0xff] %v1603
        %1620 = vst [vmem:[%s621 + $0x70] sm:$0xff] %v1604
        %1621 = vst [vmem:[%s621 + $0x78] sm:$0xff] %v1605
        %v1622 = vpack.c.bf16 %v1591, %v1590
        %v1623 = vpack.c.bf16 %v1593, %v1592
        %v1624 = vpack.c.bf16 %v1595, %v1594
        %v1625 = vpack.c.bf16 %v1597, %v1596
        %v1626 = vpack.c.bf16 %v1599, %v1598
        %v1627 = vpack.c.bf16 %v1601, %v1600
        %v1628 = vpack.c.bf16 %v1603, %v1602
        %v1629 = vpack.c.bf16 %v1605, %v1604
        %v1630 = vld [vmem:[#allocation15] sm:$0xf]
        %v1631 = vld [vmem:[#allocation15 + $0x4] sm:$0xf]
        %v1632 = vld [vmem:[#allocation15 + $0x8] sm:$0xf]
        %v1633 = vld [vmem:[#allocation15 + $0xc] sm:$0xf]
        %v1634 = vld [vmem:[#allocation15 + $0x10] sm:$0xf]
        %v1635 = vld [vmem:[#allocation15 + $0x14] sm:$0xf]
        %v1636 = vld [vmem:[#allocation15 + $0x18] sm:$0xf]
        %v1637 = vld [vmem:[#allocation15 + $0x1c] sm:$0xf]
        %v1638 = vld [vmem:[#allocation15 + $0x20] sm:$0xf]
        %v1639 = vld [vmem:[#allocation15 + $0x24] sm:$0xf]
        %v1640 = vld [vmem:[#allocation15 + $0x28] sm:$0xf]
        %v1641 = vld [vmem:[#allocation15 + $0x2c] sm:$0xf]
        %v1642 = vld [vmem:[#allocation15 + $0x30] sm:$0xf]
        %v1643 = vld [vmem:[#allocation15 + $0x34] sm:$0xf]
        %v1644 = vld [vmem:[#allocation15 + $0x38] sm:$0xf]
        %v1645 = vld [vmem:[#allocation15 + $0x3c] sm:$0xf]
        %v1646 = vld [vmem:[#allocation16] sm:$0x1]
        %v1648 = vlaneseq
        %v1649 = vshrl.u32 %v1648, 7
        %v1650 = vsub.s32 0, %v1649
        %v1651 = vrot.slane %v1646, %v1650
        %v1669 = vunpack.c.l.b16 %v1630
        %v1670 = vunpack.c.l.b16 %v1631
        %v1671 = vunpack.c.l.b16 %v1632
        %v1672 = vunpack.c.l.b16 %v1633
        %v1673 = vunpack.c.l.b16 %v1634
        %v1674 = vunpack.c.l.b16 %v1635
        %v1675 = vunpack.c.l.b16 %v1636
        %v1676 = vunpack.c.l.b16 %v1637
        %v1677 = vunpack.c.l.b16 %v1638
        %v1678 = vunpack.c.l.b16 %v1639
        %v1679 = vunpack.c.l.b16 %v1640
        %v1680 = vunpack.c.l.b16 %v1641
        %v1681 = vunpack.c.l.b16 %v1642
        %v1682 = vunpack.c.l.b16 %v1643
        %v1683 = vunpack.c.l.b16 %v1644
        %v1684 = vunpack.c.l.b16 %v1645
        %v1685 = vpack.c.b16 %v1670, %v1669
        %v1686 = vpack.c.b16 %v1672, %v1671
        %v1687 = vpack.c.b16 %v1674, %v1673
        %v1688 = vpack.c.b16 %v1676, %v1675
        %v1689 = vpack.c.b16 %v1678, %v1677
        %v1690 = vpack.c.b16 %v1680, %v1679
        %v1691 = vpack.c.b16 %v1682, %v1681
        %v1692 = vpack.c.b16 %v1684, %v1683
        %1701 = vmatprep.subr.bf16.mxu0 0
        %1702 = vmatpush1.bf16.msra.mxu0 %v1685
        %1703 = vmatprep.subr.bf16.mxu0 0
        %1704 = vmatpush1.bf16.msra.mxu0 %v1686
        %1705 = vmatprep.subr.bf16.mxu0 0
        %1706 = vmatpush1.bf16.msra.mxu0 %v1687
        %1707 = vmatprep.subr.bf16.mxu0 0
        %1708 = vmatpush1.bf16.msra.mxu0 %v1688
        %1709 = vmatprep.subr.bf16.mxu0 0
        %1710 = vmatpush1.bf16.msra.mxu0 %v1689
        %1711 = vmatprep.subr.bf16.mxu0 0
        %1712 = vmatpush1.bf16.msra.mxu0 %v1690
        %1713 = vmatprep.subr.bf16.mxu0 0
        %1714 = vmatpush1.bf16.msra.mxu0 %v1691
        %1715 = vmatprep.subr.bf16.mxu0 0
        %1716 = vmatpush1.bf16.msra.mxu0 %v1692
        %1717 = vmatprep.subr.bf16.mxu0 0
        %1718 = vmatpush1.bf16.msra.mxu0 0
        %1719 = vmatprep.subr.bf16.mxu0 0
        %1720 = vmatpush1.bf16.msra.mxu0 0
        %1721 = vmatprep.subr.bf16.mxu0 0
        %1722 = vmatpush1.bf16.msra.mxu0 0
        %1723 = vmatprep.subr.bf16.mxu0 0
        %1724 = vmatpush1.bf16.msra.mxu0 0
        %1725 = vmatprep.subr.bf16.mxu0 0
        %1726 = vmatpush1.bf16.msra.mxu0 0
        %1727 = vmatprep.subr.bf16.mxu0 0
        %1728 = vmatpush1.bf16.msra.mxu0 0
        %1729 = vmatprep.subr.bf16.mxu0 0
        %1730 = vmatpush1.bf16.msra.mxu0 0
        %1731 = vmatprep.subr.bf16.mxu0 0
        %1732 = vmatpush1.bf16.msra.mxu0 0
        %1733 = vmatprep.mubr.bf16.mxu0 0
        %1734 = vmatmul.mubr.bf16.gmra.mrb[0].mxu0 %v1622
        %v1735 = vpop.f32.mrb[0].mxu0
        %v1736 = vadd.f32 %v1651, %v1735
        %v1737 = vpop.f32.mrb[0].mxu0
        %v1738 = vpop.f32.mrb[0].mxu0
        %v1739 = vadd.f32 %v1651, %v1738
        %v1740 = vpop.f32.mrb[0].mxu0
        %1741 = vmatprep.mubr.bf16.mxu0 0
        %1742 = vmatmul.mubr.bf16.gmra.mrb[0].mxu0 %v1623
        %v1743 = vpop.f32.mrb[0].mxu0
        %v1744 = vadd.f32 %v1651, %v1743
        %v1745 = vpop.f32.mrb[0].mxu0
        %v1746 = vpop.f32.mrb[0].mxu0
        %v1747 = vadd.f32 %v1651, %v1746
        %v1748 = vpop.f32.mrb[0].mxu0
        %1749 = vmatprep.mubr.bf16.mxu0 0
        %1750 = vmatmul.mubr.bf16.gmra.mrb[0].mxu0 %v1624
        %v1751 = vpop.f32.mrb[0].mxu0
        %v1752 = vadd.f32 %v1651, %v1751
        %v1753 = vpop.f32.mrb[0].mxu0
        %v1754 = vpop.f32.mrb[0].mxu0
        %v1755 = vadd.f32 %v1651, %v1754
        %v1756 = vpop.f32.mrb[0].mxu0
        %1757 = vmatprep.mubr.bf16.mxu0 0
        %1758 = vmatmul.mubr.bf16.gmra.mrb[0].mxu0 %v1625
        %v1759 = vpop.f32.mrb[0].mxu0
        %v1760 = vadd.f32 %v1651, %v1759
        %v1761 = vpop.f32.mrb[0].mxu0
        %v1762 = vpop.f32.mrb[0].mxu0
        %v1763 = vadd.f32 %v1651, %v1762
        %v1764 = vpop.f32.mrb[0].mxu0
        %1765 = vmatprep.mubr.bf16.mxu0 0
        %1766 = vmatmul.mubr.bf16.gmra.mrb[0].mxu0 %v1626
        %v1767 = vpop.f32.mrb[0].mxu0
        %v1768 = vadd.f32 %v1651, %v1767
        %v1769 = vpop.f32.mrb[0].mxu0
        %v1770 = vpop.f32.mrb[0].mxu0
        %v1771 = vadd.f32 %v1651, %v1770
        %v1772 = vpop.f32.mrb[0].mxu0
        %1773 = vmatprep.mubr.bf16.mxu0 0
        %1774 = vmatmul.mubr.bf16.gmra.mrb[0].mxu0 %v1627
        %v1775 = vpop.f32.mrb[0].mxu0
        %v1776 = vadd.f32 %v1651, %v1775
        %v1777 = vpop.f32.mrb[0].mxu0
        %v1778 = vpop.f32.mrb[0].mxu0
        %v1779 = vadd.f32 %v1651, %v1778
        %v1780 = vpop.f32.mrb[0].mxu0
        %1781 = vmatprep.mubr.bf16.mxu0 0
        %1782 = vmatmul.mubr.bf16.gmra.mrb[0].mxu0 %v1628
        %v1783 = vpop.f32.mrb[0].mxu0
        %v1784 = vadd.f32 %v1651, %v1783
        %v1785 = vpop.f32.mrb[0].mxu0
        %v1786 = vpop.f32.mrb[0].mxu0
        %v1787 = vadd.f32 %v1651, %v1786
        %v1788 = vpop.f32.mrb[0].mxu0
        %1789 = vmatprep.mubr.bf16.mxu0 0
        %1790 = vmatmul.mubr.bf16.gmra.mrb[0].mxu0 %v1629
        %v1791 = vpop.f32.mrb[0].mxu0
        %v1792 = vadd.f32 %v1651, %v1791
        %v1793 = vpop.f32.mrb[0].mxu0
        %v1794 = vpop.f32.mrb[0].mxu0
        %v1795 = vadd.f32 %v1651, %v1794
        %v1796 = vpop.f32.mrb[0].mxu0
        %1797 = vdwg.mxu0
        %v1798 = vtanh.pop %v1736
        %v1799 = vtanh.pop %v1739
        %v1800 = vtanh.pop %v1744
        %v1801 = vtanh.pop %v1747
        %v1802 = vtanh.pop %v1752
        %v1803 = vtanh.pop %v1755
        %v1804 = vtanh.pop %v1760
        %v1805 = vtanh.pop %v1763
        %v1806 = vtanh.pop %v1768
        %v1807 = vtanh.pop %v1771
        %v1808 = vtanh.pop %v1776
        %v1809 = vtanh.pop %v1779
        %v1810 = vtanh.pop %v1784
        %v1811 = vtanh.pop %v1787
        %v1812 = vtanh.pop %v1792
        %v1813 = vtanh.pop %v1795
        %v1814 = vpack.c.bf16 %v1799, %v1798
        %v1815 = vpack.c.bf16 %v1801, %v1800
        %v1816 = vpack.c.bf16 %v1803, %v1802
        %v1817 = vpack.c.bf16 %v1805, %v1804
        %v1818 = vpack.c.bf16 %v1807, %v1806
        %v1819 = vpack.c.bf16 %v1809, %v1808
        %v1820 = vpack.c.bf16 %v1811, %v1810
        %v1821 = vpack.c.bf16 %v1813, %v1812
        %v1822 = vld [vmem:[#allocation18] sm:$0xff]
        %v1823 = vld [vmem:[#allocation18 + $0x8] sm:$0xff]
        %v1824 = vld [vmem:[#allocation18 + $0x10] sm:$0xff]
        %v1825 = vld [vmem:[#allocation18 + $0x18] sm:$0xff]
        %v1826 = vld [vmem:[#allocation18 + $0x20] sm:$0xff]
        %v1827 = vld [vmem:[#allocation18 + $0x28] sm:$0xff]
        %v1828 = vld [vmem:[#allocation18 + $0x30] sm:$0xff]
        %v1829 = vld [vmem:[#allocation18 + $0x38] sm:$0xff]
        %v1830 = vld [vmem:[#allocation18 + $0x40] sm:$0xff]
        %v1831 = vld [vmem:[#allocation18 + $0x48] sm:$0xff]
        %v1832 = vld [vmem:[#allocation18 + $0x50] sm:$0xff]
        %v1833 = vld [vmem:[#allocation18 + $0x58] sm:$0xff]
        %v1834 = vld [vmem:[#allocation18 + $0x60] sm:$0xff]
        %v1835 = vld [vmem:[#allocation18 + $0x68] sm:$0xff]
        %v1836 = vld [vmem:[#allocation18 + $0x70] sm:$0xff]
        %v1837 = vld [vmem:[#allocation18 + $0x78] sm:$0xff]
        %v1838 = vld [vmem:[#allocation19] sm:$0x3]
        %v1840 = vlaneseq
        %v1841 = vshrl.u32 %v1840, 7
        %v1842 = vsub.s32 0, %v1841
        %v1843 = vrot.slane %v1838, %v1842
        %v1844 = vlaneseq
        %v1845 = vshrl.u32 %v1844, 7
        %v1846 = vsub.s32 1, %v1845
        %v1847 = vrot.slane %v1838, %v1846
        %v1866 = vunpack.c.l.b16 %v1822
        %v1867 = vunpack.c.h.b16 %v1822
        %v1868 = vunpack.c.l.b16 %v1823
        %v1869 = vunpack.c.h.b16 %v1823
        %v1870 = vunpack.c.l.b16 %v1824
        %v1871 = vunpack.c.h.b16 %v1824
        %v1872 = vunpack.c.l.b16 %v1825
        %v1873 = vunpack.c.h.b16 %v1825
        %v1874 = vunpack.c.l.b16 %v1826
        %v1875 = vunpack.c.h.b16 %v1826
        %v1876 = vunpack.c.l.b16 %v1827
        %v1877 = vunpack.c.h.b16 %v1827
        %v1878 = vunpack.c.l.b16 %v1828
        %v1879 = vunpack.c.h.b16 %v1828
        %v1880 = vunpack.c.l.b16 %v1829
        %v1881 = vunpack.c.h.b16 %v1829
        %v1882 = vunpack.c.l.b16 %v1830
        %v1883 = vunpack.c.h.b16 %v1830
        %v1884 = vunpack.c.l.b16 %v1831
        %v1885 = vunpack.c.h.b16 %v1831
        %v1886 = vunpack.c.l.b16 %v1832
        %v1887 = vunpack.c.h.b16 %v1832
        %v1888 = vunpack.c.l.b16 %v1833
        %v1889 = vunpack.c.h.b16 %v1833
        %v1890 = vunpack.c.l.b16 %v1834
        %v1891 = vunpack.c.h.b16 %v1834
        %v1892 = vunpack.c.l.b16 %v1835
        %v1893 = vunpack.c.h.b16 %v1835
        %v1894 = vunpack.c.l.b16 %v1836
        %v1895 = vunpack.c.h.b16 %v1836
        %v1896 = vunpack.c.l.b16 %v1837
        %v1897 = vunpack.c.h.b16 %v1837
        %v1898 = vpack.c.b16 %v1868, %v1866
        %v1899 = vpack.c.b16 %v1869, %v1867
        %v1900 = vpack.c.b16 %v1872, %v1870
        %v1901 = vpack.c.b16 %v1873, %v1871
        %v1902 = vpack.c.b16 %v1876, %v1874
        %v1903 = vpack.c.b16 %v1877, %v1875
        %v1904 = vpack.c.b16 %v1880, %v1878
        %v1905 = vpack.c.b16 %v1881, %v1879
        %v1906 = vpack.c.b16 %v1884, %v1882
        %v1907 = vpack.c.b16 %v1885, %v1883
        %v1908 = vpack.c.b16 %v1888, %v1886
        %v1909 = vpack.c.b16 %v1889, %v1887
        %v1910 = vpack.c.b16 %v1892, %v1890
        %v1911 = vpack.c.b16 %v1893, %v1891
        %v1912 = vpack.c.b16 %v1896, %v1894
        %v1913 = vpack.c.b16 %v1897, %v1895
        %1930 = vmatprep.subr.bf16.mxu0 %v1899
        %1931 = vmatpush1.bf16.msra.mxu0 %v1898
        %1932 = vmatprep.subr.bf16.mxu0 %v1901
        %1933 = vmatpush1.bf16.msra.mxu0 %v1900
        %1934 = vmatprep.subr.bf16.mxu0 %v1903
        %1935 = vmatpush1.bf16.msra.mxu0 %v1902
        %1936 = vmatprep.subr.bf16.mxu0 %v1905
        %1937 = vmatpush1.bf16.msra.mxu0 %v1904
        %1938 = vmatprep.subr.bf16.mxu0 %v1907
        %1939 = vmatpush1.bf16.msra.mxu0 %v1906
        %1940 = vmatprep.subr.bf16.mxu0 %v1909
        %1941 = vmatpush1.bf16.msra.mxu0 %v1908
        %1942 = vmatprep.subr.bf16.mxu0 %v1911
        %1943 = vmatpush1.bf16.msra.mxu0 %v1910
        %1944 = vmatprep.subr.bf16.mxu0 %v1913
        %1945 = vmatpush1.bf16.msra.mxu0 %v1912
        %1946 = vmatprep.subr.bf16.mxu0 0
        %1947 = vmatpush1.bf16.msra.mxu0 0
        %1948 = vmatprep.subr.bf16.mxu0 0
        %1949 = vmatpush1.bf16.msra.mxu0 0
        %1950 = vmatprep.subr.bf16.mxu0 0
        %1951 = vmatpush1.bf16.msra.mxu0 0
        %1952 = vmatprep.subr.bf16.mxu0 0
        %1953 = vmatpush1.bf16.msra.mxu0 0
        %1954 = vmatprep.subr.bf16.mxu0 0
        %1955 = vmatpush1.bf16.msra.mxu0 0
        %1956 = vmatprep.subr.bf16.mxu0 0
        %1957 = vmatpush1.bf16.msra.mxu0 0
        %1958 = vmatprep.subr.bf16.mxu0 0
        %1959 = vmatpush1.bf16.msra.mxu0 0
        %1960 = vmatprep.subr.bf16.mxu0 0
        %1961 = vmatpush1.bf16.msra.mxu0 0
        %1962 = vmatprep.mubr.bf16.mxu0 0
        %1963 = vmatmul.mubr.bf16.gmra.mrb[0].mxu0 %v1814
        %v1964 = vpop.f32.mrb[0].mxu0
        %v1965 = vadd.f32 %v1843, %v1964
        %v1966 = vpop.f32.mrb[0].mxu0
        %v1967 = vadd.f32 %v1847, %v1966
        %v1968 = vpop.f32.mrb[0].mxu0
        %v1969 = vadd.f32 %v1843, %v1968
        %v1970 = vpop.f32.mrb[0].mxu0
        %v1971 = vadd.f32 %v1847, %v1970
        %1972 = vmatprep.mubr.bf16.mxu0 0
        %1973 = vmatmul.mubr.bf16.gmra.mrb[0].mxu0 %v1815
        %v1974 = vpop.f32.mrb[0].mxu0
        %v1975 = vadd.f32 %v1843, %v1974
        %v1976 = vpop.f32.mrb[0].mxu0
        %v1977 = vadd.f32 %v1847, %v1976
        %v1978 = vpop.f32.mrb[0].mxu0
        %v1979 = vadd.f32 %v1843, %v1978
        %v1980 = vpop.f32.mrb[0].mxu0
        %v1981 = vadd.f32 %v1847, %v1980
        %1982 = vmatprep.mubr.bf16.mxu0 0
        %1983 = vmatmul.mubr.bf16.gmra.mrb[0].mxu0 %v1816
        %v1984 = vpop.f32.mrb[0].mxu0
        %v1985 = vadd.f32 %v1843, %v1984
        %v1986 = vpop.f32.mrb[0].mxu0
        %v1987 = vadd.f32 %v1847, %v1986
        %v1988 = vpop.f32.mrb[0].mxu0
        %v1989 = vadd.f32 %v1843, %v1988
        %v1990 = vpop.f32.mrb[0].mxu0
        %v1991 = vadd.f32 %v1847, %v1990
        %1992 = vmatprep.mubr.bf16.mxu0 0
        %1993 = vmatmul.mubr.bf16.gmra.mrb[0].mxu0 %v1817
        %v1994 = vpop.f32.mrb[0].mxu0
        %v1995 = vadd.f32 %v1843, %v1994
        %v1996 = vpop.f32.mrb[0].mxu0
        %v1997 = vadd.f32 %v1847, %v1996
        %v1998 = vpop.f32.mrb[0].mxu0
        %v1999 = vadd.f32 %v1843, %v1998
        %v2000 = vpop.f32.mrb[0].mxu0
        %v2001 = vadd.f32 %v1847, %v2000
        %2002 = vmatprep.mubr.bf16.mxu0 0
        %2003 = vmatmul.mubr.bf16.gmra.mrb[0].mxu0 %v1818
        %v2004 = vpop.f32.mrb[0].mxu0
        %v2005 = vadd.f32 %v1843, %v2004
        %v2006 = vpop.f32.mrb[0].mxu0
        %v2007 = vadd.f32 %v1847, %v2006
        %v2008 = vpop.f32.mrb[0].mxu0
        %v2009 = vadd.f32 %v1843, %v2008
        %v2010 = vpop.f32.mrb[0].mxu0
        %v2011 = vadd.f32 %v1847, %v2010
        %2012 = vmatprep.mubr.bf16.mxu0 0
        %2013 = vmatmul.mubr.bf16.gmra.mrb[0].mxu0 %v1819
        %v2014 = vpop.f32.mrb[0].mxu0
        %v2015 = vadd.f32 %v1843, %v2014
        %v2016 = vpop.f32.mrb[0].mxu0
        %v2017 = vadd.f32 %v1847, %v2016
        %v2018 = vpop.f32.mrb[0].mxu0
        %v2019 = vadd.f32 %v1843, %v2018
        %v2020 = vpop.f32.mrb[0].mxu0
        %v2021 = vadd.f32 %v1847, %v2020
        %2022 = vmatprep.mubr.bf16.mxu0 0
        %2023 = vmatmul.mubr.bf16.gmra.mrb[0].mxu0 %v1820
        %v2024 = vpop.f32.mrb[0].mxu0
        %v2025 = vadd.f32 %v1843, %v2024
        %v2026 = vpop.f32.mrb[0].mxu0
        %v2027 = vadd.f32 %v1847, %v2026
        %v2028 = vpop.f32.mrb[0].mxu0
        %v2029 = vadd.f32 %v1843, %v2028
        %v2030 = vpop.f32.mrb[0].mxu0
        %v2031 = vadd.f32 %v1847, %v2030
        %2032 = vmatprep.mubr.bf16.mxu0 0
        %2033 = vmatmul.mubr.bf16.gmra.mrb[0].mxu0 %v1821
        %v2034 = vpop.f32.mrb[0].mxu0
        %v2035 = vadd.f32 %v1843, %v2034
        %v2036 = vpop.f32.mrb[0].mxu0
        %v2037 = vadd.f32 %v1847, %v2036
        %v2038 = vpop.f32.mrb[0].mxu0
        %v2039 = vadd.f32 %v1843, %v2038
        %v2040 = vpop.f32.mrb[0].mxu0
        %v2041 = vadd.f32 %v1847, %v2040
        %2042 = vdwg.mxu0
        %v2043 = vxor.u32 %v1965, 2147483648
        %v2044 = vxor.u32 %v1967, 2147483648
        %v2045 = vxor.u32 %v1969, 2147483648
        %v2046 = vxor.u32 %v1971, 2147483648
        %v2047 = vxor.u32 %v1975, 2147483648
        %v2048 = vxor.u32 %v1977, 2147483648
        %v2049 = vxor.u32 %v1979, 2147483648
        %v2050 = vxor.u32 %v1981, 2147483648
        %v2051 = vxor.u32 %v1985, 2147483648
        %v2052 = vxor.u32 %v1987, 2147483648
        %v2053 = vxor.u32 %v1989, 2147483648
        %v2054 = vxor.u32 %v1991, 2147483648
        %v2055 = vxor.u32 %v1995, 2147483648
        %v2056 = vxor.u32 %v1997, 2147483648
        %v2057 = vxor.u32 %v1999, 2147483648
        %v2058 = vxor.u32 %v2001, 2147483648
        %v2059 = vxor.u32 %v2005, 2147483648
        %v2060 = vxor.u32 %v2007, 2147483648
        %v2061 = vxor.u32 %v2009, 2147483648
        %v2062 = vxor.u32 %v2011, 2147483648
        %v2063 = vxor.u32 %v2015, 2147483648
        %v2064 = vxor.u32 %v2017, 2147483648
        %v2065 = vxor.u32 %v2019, 2147483648
        %v2066 = vxor.u32 %v2021, 2147483648
        %v2067 = vxor.u32 %v2025, 2147483648
        %v2068 = vxor.u32 %v2027, 2147483648
        %v2069 = vxor.u32 %v2029, 2147483648
        %v2070 = vxor.u32 %v2031, 2147483648
        %v2071 = vxor.u32 %v2035, 2147483648
        %v2072 = vxor.u32 %v2037, 2147483648
        %v2073 = vxor.u32 %v2039, 2147483648
        %v2074 = vxor.u32 %v2041, 2147483648
        %v2075 = vmul.f32 %v2043, 1.442695
        %v2076 = vpow.pop %v2075
        %v2077 = vmul.f32 %v2044, 1.442695
        %v2078 = vpow.pop %v2077
        %v2079 = vmul.f32 %v2045, 1.442695
        %v2080 = vpow.pop %v2079
        %v2081 = vmul.f32 %v2046, 1.442695
        %v2082 = vpow.pop %v2081
        %v2083 = vmul.f32 %v2047, 1.442695
        %v2084 = vpow.pop %v2083
        %v2085 = vmul.f32 %v2048, 1.442695
        %v2086 = vpow.pop %v2085
        %v2087 = vmul.f32 %v2049, 1.442695
        %v2088 = vpow.pop %v2087
        %v2089 = vmul.f32 %v2050, 1.442695
        %v2090 = vpow.pop %v2089
        %v2091 = vmul.f32 %v2051, 1.442695
        %v2092 = vpow.pop %v2091
        %v2093 = vmul.f32 %v2052, 1.442695
        %v2094 = vpow.pop %v2093
        %v2095 = vmul.f32 %v2053, 1.442695
        %v2096 = vpow.pop %v2095
        %v2097 = vmul.f32 %v2054, 1.442695
        %v2098 = vpow.pop %v2097
        %v2099 = vmul.f32 %v2055, 1.442695
        %v2100 = vpow.pop %v2099
        %v2101 = vmul.f32 %v2056, 1.442695
        %v2102 = vpow.pop %v2101
        %v2103 = vmul.f32 %v2057, 1.442695
        %v2104 = vpow.pop %v2103
        %v2105 = vmul.f32 %v2058, 1.442695
        %v2106 = vpow.pop %v2105
        %v2107 = vmul.f32 %v2059, 1.442695
        %v2108 = vpow.pop %v2107
        %v2109 = vmul.f32 %v2060, 1.442695
        %v2110 = vpow.pop %v2109
        %v2111 = vmul.f32 %v2061, 1.442695
        %v2112 = vpow.pop %v2111
        %v2113 = vmul.f32 %v2062, 1.442695
        %v2114 = vpow.pop %v2113
        %v2115 = vmul.f32 %v2063, 1.442695
        %v2116 = vpow.pop %v2115
        %v2117 = vmul.f32 %v2064, 1.442695
        %v2118 = vpow.pop %v2117
        %v2119 = vmul.f32 %v2065, 1.442695
        %v2120 = vpow.pop %v2119
        %v2121 = vmul.f32 %v2066, 1.442695
        %v2122 = vpow.pop %v2121
        %v2123 = vmul.f32 %v2067, 1.442695
        %v2124 = vpow.pop %v2123
        %v2125 = vmul.f32 %v2068, 1.442695
        %v2126 = vpow.pop %v2125
        %v2127 = vmul.f32 %v2069, 1.442695
        %v2128 = vpow.pop %v2127
        %v2129 = vmul.f32 %v2070, 1.442695
        %v2130 = vpow.pop %v2129
        %v2131 = vmul.f32 %v2071, 1.442695
        %v2132 = vpow.pop %v2131
        %v2133 = vmul.f32 %v2072, 1.442695
        %v2134 = vpow.pop %v2133
        %v2135 = vmul.f32 %v2073, 1.442695
        %v2136 = vpow.pop %v2135
        %v2137 = vmul.f32 %v2074, 1.442695
        %v2138 = vpow.pop %v2137
        %v2139 = vadd.f32 %v2076, 1.0
        %v2140 = vadd.f32 %v2078, 1.0
        %v2141 = vadd.f32 %v2080, 1.0
        %v2142 = vadd.f32 %v2082, 1.0
        %v2143 = vadd.f32 %v2084, 1.0
        %v2144 = vadd.f32 %v2086, 1.0
        %v2145 = vadd.f32 %v2088, 1.0
        %v2146 = vadd.f32 %v2090, 1.0
        %v2147 = vadd.f32 %v2092, 1.0
        %v2148 = vadd.f32 %v2094, 1.0
        %v2149 = vadd.f32 %v2096, 1.0
        %v2150 = vadd.f32 %v2098, 1.0
        %v2151 = vadd.f32 %v2100, 1.0
        %v2152 = vadd.f32 %v2102, 1.0
        %v2153 = vadd.f32 %v2104, 1.0
        %v2154 = vadd.f32 %v2106, 1.0
        %v2155 = vadd.f32 %v2108, 1.0
        %v2156 = vadd.f32 %v2110, 1.0
        %v2157 = vadd.f32 %v2112, 1.0
        %v2158 = vadd.f32 %v2114, 1.0
        %v2159 = vadd.f32 %v2116, 1.0
        %v2160 = vadd.f32 %v2118, 1.0
        %v2161 = vadd.f32 %v2120, 1.0
        %v2162 = vadd.f32 %v2122, 1.0
        %v2163 = vadd.f32 %v2124, 1.0
        %v2164 = vadd.f32 %v2126, 1.0
        %v2165 = vadd.f32 %v2128, 1.0
        %v2166 = vadd.f32 %v2130, 1.0
        %v2167 = vadd.f32 %v2132, 1.0
        %v2168 = vadd.f32 %v2134, 1.0
        %v2169 = vadd.f32 %v2136, 1.0
        %v2170 = vadd.f32 %v2138, 1.0
        %v2171 = vrcp.pop %v2139
        %v2172 = vmul.f32 1.0, %v2171
        %v2173 = vrcp.pop %v2140
        %v2174 = vmul.f32 1.0, %v2173
        %v2175 = vrcp.pop %v2141
        %v2176 = vmul.f32 1.0, %v2175
        %v2177 = vrcp.pop %v2142
        %v2178 = vmul.f32 1.0, %v2177
        %v2179 = vrcp.pop %v2143
        %v2180 = vmul.f32 1.0, %v2179
        %v2181 = vrcp.pop %v2144
        %v2182 = vmul.f32 1.0, %v2181
        %v2183 = vrcp.pop %v2145
        %v2184 = vmul.f32 1.0, %v2183
        %v2185 = vrcp.pop %v2146
        %v2186 = vmul.f32 1.0, %v2185
        %v2187 = vrcp.pop %v2147
        %v2188 = vmul.f32 1.0, %v2187
        %v2189 = vrcp.pop %v2148
        %v2190 = vmul.f32 1.0, %v2189
        %v2191 = vrcp.pop %v2149
        %v2192 = vmul.f32 1.0, %v2191
        %v2193 = vrcp.pop %v2150
        %v2194 = vmul.f32 1.0, %v2193
        %v2195 = vrcp.pop %v2151
        %v2196 = vmul.f32 1.0, %v2195
        %v2197 = vrcp.pop %v2152
        %v2198 = vmul.f32 1.0, %v2197
        %v2199 = vrcp.pop %v2153
        %v2200 = vmul.f32 1.0, %v2199
        %v2201 = vrcp.pop %v2154
        %v2202 = vmul.f32 1.0, %v2201
        %v2203 = vrcp.pop %v2155
        %v2204 = vmul.f32 1.0, %v2203
        %v2205 = vrcp.pop %v2156
        %v2206 = vmul.f32 1.0, %v2205
        %v2207 = vrcp.pop %v2157
        %v2208 = vmul.f32 1.0, %v2207
        %v2209 = vrcp.pop %v2158
        %v2210 = vmul.f32 1.0, %v2209
        %v2211 = vrcp.pop %v2159
        %v2212 = vmul.f32 1.0, %v2211
        %v2213 = vrcp.pop %v2160
        %v2214 = vmul.f32 1.0, %v2213
        %v2215 = vrcp.pop %v2161
        %v2216 = vmul.f32 1.0, %v2215
        %v2217 = vrcp.pop %v2162
        %v2218 = vmul.f32 1.0, %v2217
        %v2219 = vrcp.pop %v2163
        %v2220 = vmul.f32 1.0, %v2219
        %v2221 = vrcp.pop %v2164
        %v2222 = vmul.f32 1.0, %v2221
        %v2223 = vrcp.pop %v2165
        %v2224 = vmul.f32 1.0, %v2223
        %v2225 = vrcp.pop %v2166
        %v2226 = vmul.f32 1.0, %v2225
        %v2227 = vrcp.pop %v2167
        %v2228 = vmul.f32 1.0, %v2227
        %v2229 = vrcp.pop %v2168
        %v2230 = vmul.f32 1.0, %v2229
        %v2231 = vrcp.pop %v2169
        %v2232 = vmul.f32 1.0, %v2231
        %v2233 = vrcp.pop %v2170
        %v2234 = vmul.f32 1.0, %v2233
        %v2235 = vpack.c.bf16 %v2176, %v2172
        %v2236 = vpack.c.bf16 %v2178, %v2174
        %v2237 = vpack.c.bf16 %v2184, %v2180
        %v2238 = vpack.c.bf16 %v2186, %v2182
        %v2239 = vpack.c.bf16 %v2192, %v2188
        %v2240 = vpack.c.bf16 %v2194, %v2190
        %v2241 = vpack.c.bf16 %v2200, %v2196
        %v2242 = vpack.c.bf16 %v2202, %v2198
        %v2243 = vpack.c.bf16 %v2208, %v2204
        %v2244 = vpack.c.bf16 %v2210, %v2206
        %v2245 = vpack.c.bf16 %v2216, %v2212
        %v2246 = vpack.c.bf16 %v2218, %v2214
        %v2247 = vpack.c.bf16 %v2224, %v2220
        %v2248 = vpack.c.bf16 %v2226, %v2222
        %v2249 = vpack.c.bf16 %v2232, %v2228
        %v2250 = vpack.c.bf16 %v2234, %v2230
        %v2267 = vunpack.c.l.b16 %v2235
        %v2268 = vunpack.c.l.b16 %v2236
        %v2269 = vunpack.c.h.b16 %v2235
        %v2270 = vunpack.c.h.b16 %v2236
        %v2271 = vunpack.c.l.b16 %v2237
        %v2272 = vunpack.c.l.b16 %v2238
        %v2273 = vunpack.c.h.b16 %v2237
        %v2274 = vunpack.c.h.b16 %v2238
        %v2275 = vunpack.c.l.b16 %v2239
        %v2276 = vunpack.c.l.b16 %v2240
        %v2277 = vunpack.c.h.b16 %v2239
        %v2278 = vunpack.c.h.b16 %v2240
        %v2279 = vunpack.c.l.b16 %v2241
        %v2280 = vunpack.c.l.b16 %v2242
        %v2281 = vunpack.c.h.b16 %v2241
        %v2282 = vunpack.c.h.b16 %v2242
        %v2283 = vunpack.c.l.b16 %v2243
        %v2284 = vunpack.c.l.b16 %v2244
        %v2285 = vunpack.c.h.b16 %v2243
        %v2286 = vunpack.c.h.b16 %v2244
        %v2287 = vunpack.c.l.b16 %v2245
        %v2288 = vunpack.c.l.b16 %v2246
        %v2289 = vunpack.c.h.b16 %v2245
        %v2290 = vunpack.c.h.b16 %v2246
        %v2291 = vunpack.c.l.b16 %v2247
        %v2292 = vunpack.c.l.b16 %v2248
        %v2293 = vunpack.c.h.b16 %v2247
        %v2294 = vunpack.c.h.b16 %v2248
        %v2295 = vunpack.c.l.b16 %v2249
        %v2296 = vunpack.c.l.b16 %v2250
        %v2297 = vunpack.c.h.b16 %v2249
        %v2298 = vunpack.c.h.b16 %v2250
        %v2299 = vpack.c.b16 %v2268, %v2267
        %v2300 = vpack.c.b16 %v2270, %v2269
        %v2301 = vpack.c.b16 %v2272, %v2271
        %v2302 = vpack.c.b16 %v2274, %v2273
        %v2303 = vpack.c.b16 %v2276, %v2275
        %v2304 = vpack.c.b16 %v2278, %v2277
        %v2305 = vpack.c.b16 %v2280, %v2279
        %v2306 = vpack.c.b16 %v2282, %v2281
        %v2307 = vpack.c.b16 %v2284, %v2283
        %v2308 = vpack.c.b16 %v2286, %v2285
        %v2309 = vpack.c.b16 %v2288, %v2287
        %v2310 = vpack.c.b16 %v2290, %v2289
        %v2311 = vpack.c.b16 %v2292, %v2291
        %v2312 = vpack.c.b16 %v2294, %v2293
        %v2313 = vpack.c.b16 %v2296, %v2295
        %v2314 = vpack.c.b16 %v2298, %v2297
        %2331 = vst [vmem:[%s614] sm:$0xff] %v2299
        %2332 = vst [vmem:[%s614 + $0x8] sm:$0xff] %v2300
        %2333 = vst [vmem:[%s614 + $0x10] sm:$0xff] %v2301
        %2334 = vst [vmem:[%s614 + $0x18] sm:$0xff] %v2302
        %2335 = vst [vmem:[%s614 + $0x20] sm:$0xff] %v2303
        %2336 = vst [vmem:[%s614 + $0x28] sm:$0xff] %v2304
        %2337 = vst [vmem:[%s614 + $0x30] sm:$0xff] %v2305
        %2338 = vst [vmem:[%s614 + $0x38] sm:$0xff] %v2306
        %2339 = vst [vmem:[%s614 + $0x40] sm:$0xff] %v2307
        %2340 = vst [vmem:[%s614 + $0x48] sm:$0xff] %v2308
        %2341 = vst [vmem:[%s614 + $0x50] sm:$0xff] %v2309
        %2342 = vst [vmem:[%s614 + $0x58] sm:$0xff] %v2310
        %2343 = vst [vmem:[%s614 + $0x60] sm:$0xff] %v2311
        %2344 = vst [vmem:[%s614 + $0x68] sm:$0xff] %v2312
        %2345 = vst [vmem:[%s614 + $0x70] sm:$0xff] %v2313
        %2346 = vst [vmem:[%s614 + $0x78] sm:$0xff] %v2314
        %s2347 = sand.u32 %s35, 1
        %s2348 = scalar_lea.sflag [#allocation6], %s2347
        %s2349 = sand.u32 %s331, 1
        %s2350 = smul.addr %s2349, 128
        %s2351 = scalar_lea.vmem [#allocation24], %s2350
        %s2352 = sand.u32 %s35, 1
        %s2353 = scalar_lea.sflag [#allocation6], %s2352
        %s2354 = sand.u32 %s359, 1
        %s2355 = smul.addr %s2354, 128
        %s2356 = scalar_lea.vmem [#allocation25], %s2355
        // Predicated region
        $region105: #{iwae_forward.1} parent=59 // pred_check
          %p2357 = pneg %p287
        $region106: #{iwae_forward.1} parent=59 // pred_check_branch
          %2359 = sbr.rel (%p2357) target = $region108
        $region107: #{iwae_forward.1} parent=59 // pred_region
          %s2360 = smul.u32 16, %s39
          %s2362 = ssub.s32 2048, 2048
          %2363 = vsyncadd [#allocation6], %s2362
          %s2364 = smul.addr %s2360, 128
          %s2365 = scalar_lea.hbm %s10, %s2364
          %s2366 = sshll.u32 [#allocation21], 4
          %s2367 = int_to_ptr.vmem [resolvable:$true] %s2366
          %2372 = dma.vmem_to_hbm [thread:$0]  %s2367, 2048, %s2365, [#allocation6], 128, 128, 8
        $region108: #{iwae_forward.1} parent=59 // pred_fallthru
          _
        // Predicated region
        $region109: #{iwae_forward.1} parent=59 // pred_check
          %p2373 = pneg %p313
        $region110: #{iwae_forward.1} parent=59 // pred_check_branch
          %2375 = sbr.rel (%p2373) target = $region112
        $region111: #{iwae_forward.1} parent=59 // pred_region
          %s2376 = smul.u32 16, %s39
          %s2378 = ssub.s32 2048, 2048
          %2379 = vsyncadd [#allocation23], %s2378
          %s2380 = smul.addr %s2376, 128
          %s2381 = scalar_lea.hbm %s11, %s2380
          %s2382 = sshll.u32 [#allocation22], 4
          %s2383 = int_to_ptr.vmem [resolvable:$true] %s2382
          %2388 = dma.vmem_to_hbm [thread:$0]  %s2383, 2048, %s2381, [#allocation23], 128, 128, 8
        $region112: #{iwae_forward.1} parent=59 // pred_fallthru
          _
        // Predicated region
        $region113: #{iwae_forward.1} parent=59 // pred_check
          %p2389 = pneg %p341
        $region114: #{iwae_forward.1} parent=59 // pred_check_branch
          %2391 = sbr.rel (%p2389) target = $region116
        $region115: #{iwae_forward.1} parent=59 // pred_region
          %s2392 = smul.u32 16, %s39
          %s2394 = ssub.s32 2048, 2048
          %2395 = vsyncadd %s2348, %s2394
          %s2396 = smul.addr %s2392, 2
          %s2397 = smul.addr %s40, 32
          %s2398 = sadd.s32 %s2396, %s2397
          %s2399 = smul.addr %s2398, 64
          %s2400 = scalar_lea.hbm %s12, %s2399
          %s2401 = sshll.u32 %s2351, 4
          %s2402 = int_to_ptr.vmem [resolvable:$true] %s2401
          %2407 = dma.vmem_to_hbm [thread:$0]  %s2402, 2048, %s2400, %s2348, 128, 128, 8
        $region116: #{iwae_forward.1} parent=59 // pred_fallthru
          _
        // Predicated region
        $region117: #{iwae_forward.1} parent=59 // pred_check
          %p2408 = pneg %p369
        $region118: #{iwae_forward.1} parent=59 // pred_check_branch
          %2410 = sbr.rel (%p2408) target = $region120
        $region119: #{iwae_forward.1} parent=59 // pred_region
          %s2411 = smul.u32 16, %s39
          %s2413 = ssub.s32 2048, 2048
          %2414 = vsyncadd %s2353, %s2413
          %s2415 = smul.addr %s40, 16
          %s2416 = sadd.s32 %s2411, %s2415
          %s2417 = smul.addr %s2416, 128
          %s2418 = scalar_lea.hbm %s13, %s2417
          %s2419 = sshll.u32 %s2356, 4
          %s2420 = int_to_ptr.vmem [resolvable:$true] %s2419
          %2425 = dma.vmem_to_hbm [thread:$0]  %s2420, 2048, %s2418, %s2353, 128, 128, 8
        $region120: #{iwae_forward.1} parent=59 // pred_fallthru
          _
        // Predicated region
        $region121: #{iwae_forward.1} parent=59 // pred_check
          %p2426 = pneg %p287
        $region122: #{iwae_forward.1} parent=59 // pred_check_branch
          %2428 = sbr.rel (%p2426) target = $region124
        $region123: #{iwae_forward.1} parent=59 // pred_region
          %2429 = dma.done [#allocation6], 2048
        $region124: #{iwae_forward.1} parent=59 // pred_fallthru
          _
        // Predicated region
        $region125: #{iwae_forward.1} parent=59 // pred_check
          %p2430 = pneg %p313
        $region126: #{iwae_forward.1} parent=59 // pred_check_branch
          %2432 = sbr.rel (%p2430) target = $region128
        $region127: #{iwae_forward.1} parent=59 // pred_region
          %2433 = dma.done [#allocation23], 2048
        $region128: #{iwae_forward.1} parent=59 // pred_fallthru
          _
      $region60: #{iwae_forward.1} parent=5 // pred_fallthru
        _
      %p2434 = scmp.le.s32.totalorder 2, %s30
      // Predicated region
      $region129: #{iwae_forward.1} parent=5 // pred_check
        %p2435 = pneg %p2434
      $region130: #{iwae_forward.1} parent=5 // pred_check_branch
        %2437 = sbr.rel (%p2435) target = $region132
      $region131: #{iwae_forward.1} parent=5 // pred_region
        %s2438 = ssub.s32 %s30, 2
        // Predicated region
        $region133: #{iwae_forward.1} parent=131 // pred_check
          %p2439 = pneg %p347
        $region134: #{iwae_forward.1} parent=131 // pred_check_branch
          %2441 = sbr.rel (%p2439) target = $region136
        $region135: #{iwae_forward.1} parent=131 // pred_region
          %s2442 = sand.u32 %s36, 1
          %s2443 = scalar_lea.sflag [#allocation6], %s2442
          %s2444 = sand.u32 %s332, 1
          %s2445 = smul.addr %s2444, 128
          %s2446 = scalar_lea.vmem [#allocation24], %s2445
          %2447 = dma.done %s2443, 2048
        $region136: #{iwae_forward.1} parent=131 // pred_fallthru
          _
        // Predicated region
        $region137: #{iwae_forward.1} parent=131 // pred_check
          %p2448 = pneg %p375
        $region138: #{iwae_forward.1} parent=131 // pred_check_branch
          %2450 = sbr.rel (%p2448) target = $region140
        $region139: #{iwae_forward.1} parent=131 // pred_region
          %s2451 = sand.u32 %s36, 1
          %s2452 = scalar_lea.sflag [#allocation6], %s2451
          %s2453 = sand.u32 %s360, 1
          %s2454 = smul.addr %s2453, 128
          %s2455 = scalar_lea.vmem [#allocation25], %s2454
          %2456 = dma.done %s2452, 2048
        $region140: #{iwae_forward.1} parent=131 // pred_fallthru
          _
      $region132: #{iwae_forward.1} parent=5 // pred_fallthru
        _
    $region6: #{iwae_forward.1} parent=1 // loop_footer
      %s34 = sadd.s32 1, %s30
    $region7: #{iwae_forward.1} parent=1 // loop_footer_branch
      %29 = sbr.rel target = $region3
    $region8: #{iwae_forward.1} parent=1 // loop_exit
      _
    %2457 = vsyncpa [#allocation5], 1
    %s2458 = scalar_lea.sflag [#allocation5], 1
    %2459 = vsyncpa %s2458, 1
    %2460 = vsyncpa [#allocation8], 1
    %s2461 = scalar_lea.sflag [#allocation8], 1
    %2462 = vsyncpa %s2461, 1
    %2463 = vsyncpa [#allocation11], 1
    %2464 = vsyncpa [#allocation14], 1
    %2465 = vsyncpa [#allocation17], 1
    %2466 = vsyncpa [#allocation20], 1
    %2467 = vsyncpa [#allocation6], 1
    %s2468 = scalar_lea.sflag [#allocation6], 1
    %2469 = vsyncpa %s2468, 1
    %2470 = vsyncpa [#allocation23], 1

</llo_original>
